<compile_context>
chip_gen: v7x
topology: tpu7x:2x2x1
jax: 0.10.0
libtpu: 0.0.40
codegen_flags: <defaults>
</compile_context>

<pallas_src>
import functools

import jax
import jax.numpy as jnp
import numpy as np
from jax import lax
from jax.experimental import pallas as pl
from jax.experimental.pallas import tpu as pltpu

EPS = 1e-5


# ------------------------------ Pallas kernels ------------------------------ #

def conv1_stats_kernel(xcol_ref, w1_ref, y_ref, stats_ref):
    """conv1 (im2col, taps folded into K) for one M-tile + BN-stat accumulation.

    xcol_ref : (TM, K)     bf16 im2col rows for this M-tile (K = 3*3*2*Cin)
    w1_ref   : (K, Cout)   bf16 conv1 weight with taps folded into K
    y_ref    : (TM, Cout)  f32 pre-BN conv1 output tile
    stats_ref: (2, Cout)   f32 [sum; sum_of_squares], accumulated across tiles
    """
    y = jnp.dot(xcol_ref[...], w1_ref[...], preferred_element_type=jnp.float32)
    y_ref[...] = y

    @pl.when(pl.program_id(0) == 0)
    def _init():
        stats_ref[...] = jnp.zeros_like(stats_ref)

    s = jnp.sum(y, axis=0, keepdims=True)        # (1, Cout)
    sq = jnp.sum(y * y, axis=0, keepdims=True)   # (1, Cout)
    stats_ref[...] += jnp.concatenate([s, sq], axis=0)


def bn_relu_conv2_kernel(y_ref, stats_ref, g_ref, b_ref, w2_ref, o_ref, *, inv_m):
    """Folded BatchNorm (global batch stats) + ReLU + 1x1x1 conv (matmul)."""
    mean = stats_ref[0:1, :] * inv_m                       # (1, Cout)
    var = stats_ref[1:2, :] * inv_m - mean * mean
    scale = g_ref[...] * lax.rsqrt(var + EPS)              # EUP rsqrt
    shift = b_ref[...] - mean * scale
    a = jnp.maximum(y_ref[...] * scale + shift, 0.0)       # f32 VPU math
    o_ref[...] = jnp.dot(a.astype(w2_ref.dtype), w2_ref[...],
                         preferred_element_type=jnp.float32).astype(o_ref.dtype)


# --------------------------------- wrapper ---------------------------------- #

def _pick_tile(m):
    """Largest (8,128)-friendly M tile that divides m (cap 256 rows)."""
    for t in (256, 128, 64, 32, 16, 8):
        if m % t == 0:
            return t
    return m  # full-extent block is always legal


def c5_head_forward(x_ncdhw, params, bs):
    """Pallas forward of C5_head; x is NCDHW like the PyTorch module."""
    n, cin, d, h, w = x_ncdhw.shape
    kd, kh, kw = 3, 3, 2
    do, ho, wo = d - kd + 1, h - kh + 1, w - kw + 1
    cout = params["w1"].shape[-1]

    # NCDHW -> NDHWC, then im2col (wrapper-side XLA) so conv1 is one matmul
    # with an MXU-friendly contraction dim K = 18 * Cin.
    x_ndhwc = jnp.transpose(x_ncdhw, (0, 2, 3, 4, 1))
    taps = []
    for ka in range(kd):
        for kb in range(kh):
            for kc in range(kw):
                taps.append(x_ndhwc[:, ka:ka + do, kb:kb + ho, kc:kc + wo, :])
    m = n * do * ho * wo
    k = kd * kh * kw * cin
    xcol = jnp.concatenate(taps, axis=-1).reshape(m, k).astype(jnp.bfloat16)

    w1col = params["w1"].reshape(k, cout).astype(jnp.bfloat16)  # (K, Cout), DHWI-major
    w2 = params["w2"].astype(jnp.bfloat16)                      # (Cout, Cout)
    gamma = params["g"].reshape(1, cout).astype(jnp.float32)
    beta = params["b"].reshape(1, cout).astype(jnp.float32)

    tm = _pick_tile(m)
    grid = (m // tm,)

    # Pass 1: conv1 tiles + global per-channel sum / sumsq.
    # stats is an output-resident accumulator across the M axis -> "arbitrary".
    y1, stats = pl.pallas_call(
        conv1_stats_kernel,
        out_shape=(jax.ShapeDtypeStruct((m, cout), jnp.float32),
                   jax.ShapeDtypeStruct((2, cout), jnp.float32)),
        grid=grid,
        in_specs=[pl.BlockSpec((tm, k), lambda i: (i, 0)),
                  pl.BlockSpec((k, cout), lambda i: (0, 0))],
        out_specs=(pl.BlockSpec((tm, cout), lambda i: (i, 0)),
                   pl.BlockSpec((2, cout), lambda i: (0, 0))),
        compiler_params=pltpu.CompilerParams(
            dimension_semantics=("arbitrary",)),
    )(xcol, w1col)

    # Pass 2: BN (global stats) folded to scale/shift + ReLU + 1x1x1 conv.
    # Tiles are independent -> "parallel" (v7x: shards across both TensorCores).
    out2d = pl.pallas_call(
        functools.partial(bn_relu_conv2_kernel, inv_m=1.0 / m),
        out_shape=jax.ShapeDtypeStruct((m, cout), jnp.float32),
        grid=grid,
        in_specs=[pl.BlockSpec((tm, cout), lambda i: (i, 0)),
                  pl.BlockSpec((2, cout), lambda i: (0, 0)),
                  pl.BlockSpec((1, cout), lambda i: (0, 0)),
                  pl.BlockSpec((1, cout), lambda i: (0, 0)),
                  pl.BlockSpec((cout, cout), lambda i: (0, 0))],
        out_specs=pl.BlockSpec((tm, cout), lambda i: (i, 0)),
        compiler_params=pltpu.CompilerParams(
            dimension_semantics=("parallel",)),
    )(y1, stats, gamma, beta, w2)

    # Flat NDHWC -> NCDHW -> (bs, N//bs, C*Do*Ho*Wo), matching torch.reshape order.
    out = out2d.reshape(n, do, ho, wo, cout)
    out = jnp.transpose(out, (0, 4, 1, 2, 3))
    return out.reshape(bs, n // bs, cout * do * ho * wo)


# ----------------------------- pure-JAX reference ---------------------------- #

def reference_forward(x_ncdhw, params, bs, dot_dtype=jnp.float32):
    x = jnp.transpose(x_ncdhw, (0, 2, 3, 4, 1)).astype(dot_dtype)
    w1 = params["w1"].astype(dot_dtype)          # (3,3,2,Cin,Cout) = DHWIO
    y = lax.conv_general_dilated(
        x, w1, window_strides=(1, 1, 1), padding="VALID",
        dimension_numbers=("NDHWC", "DHWIO", "NDHWC"),
        preferred_element_type=jnp.float32,
        precision=lax.Precision.HIGHEST)
    mean = jnp.mean(y, axis=(0, 1, 2, 3), keepdims=True)
    var = jnp.mean((y - mean) ** 2, axis=(0, 1, 2, 3), keepdims=True)
    y = ((y - mean) * lax.rsqrt(var + EPS)
         * params["g"].reshape(1, 1, 1, 1, -1)
         + params["b"].reshape(1, 1, 1, 1, -1))
    y = jax.nn.relu(y)
    y = jnp.einsum("ndhwc,co->ndhwo",
                   y.astype(dot_dtype), params["w2"].astype(dot_dtype),
                   preferred_element_type=jnp.float32,
                   precision=lax.Precision.HIGHEST)
    y = jnp.transpose(y, (0, 4, 1, 2, 3))
    n, c, do, ho, wo = y.shape
    return y.reshape(bs, n // bs, c * do * ho * wo)


# ----------------------------------- main ------------------------------------ #

def init_params(key, cin, cout):
    k1, k2, k3, k4 = jax.random.split(key, 4)
    f32 = jnp.float32
    return {
        "w1": (0.05 * jax.random.normal(k1, (3, 3, 2, cin, cout))).astype(f32),  # DHWIO
        "w2": (0.10 * jax.random.normal(k2, (cout, cout))).astype(f32),          # (Cin2, Cout2)
        "g": (1.0 + 0.1 * jax.random.normal(k3, (cout,))).astype(f32),
        "b": (0.1 * jax.random.normal(k4, (cout,))).astype(f32),
    }


if __name__ == "__main__":
    key = jax.random.PRNGKey(0)
    kp, kx = jax.random.split(key)

    # Small but TPU-friendly shapes: M = N*Do*Ho*Wo = 16*4*4*4 = 1024 rows,
    # K = 18*Cin = 1152 (9*128), Cout = 128 (lane-dense).
    N, Cin, D, H, W = 16, 64, 6, 6, 5
    Cout = 128
    bs = 2

    params = init_params(kp, Cin, Cout)
    x = jax.random.normal(kx, (N, Cin, D, H, W), jnp.float32)   # NCDHW, like PyTorch

    fwd = jax.jit(c5_head_forward, static_argnums=2)
    out = jax.block_until_ready(fwd(x, params, bs))

    do, ho, wo = D - 2, H - 2, W - 1
    assert out.shape == (bs, N // bs, Cout * do * ho * wo)

    # Tight structural check vs a reference that mirrors the intentional
    # bf16-matmul / f32-accumulate precision of the kernels.
    ref_bf16 = reference_forward(x, params, bs, dot_dtype=jnp.bfloat16)
    np.testing.assert_allclose(np.asarray(out), np.asarray(ref_bf16),
                               rtol=2e-3, atol=2e-3)

    # Loose sanity check vs the full-f32 HIGHEST-precision module semantics
    # (documents / bounds the intentional bf16 precision change).
    ref_f32 = reference_forward(x, params, bs, dot_dtype=jnp.float32)
    np.testing.assert_allclose(np.asarray(out), np.asarray(ref_f32),
                               rtol=5e-2, atol=7.5e-2)

    print("KERNEL_OK")
</pallas_src>

<mosaic_0001>
module attributes {stable_mosaic.version = 11 : i64} {
  func.func @conv1_stats_kernel(%arg0: i32, %arg1: memref<256x1152xbf16, #tpu.memory_space<vmem>>, %arg2: memref<1152x128xbf16, #tpu.memory_space<vmem>>, %arg3: memref<256x128xf32, #tpu.memory_space<vmem>>, %arg4: memref<2x128xf32, #tpu.memory_space<vmem>>) attributes {dimension_semantics = [#tpu.dimension_semantics<arbitrary>], iteration_bounds = array<i64: 4>, scalar_prefetch = 0 : i64, scratch_operands = 0 : i64, tpu.core_type = #tpu.core_type<tc>, window_params = [{transform_indices = @transform_0, window_bounds = array<i64: 256, 1152>}, {pipeline_mode = #tpu.pipeline_mode<synchronous>, transform_indices = @transform_1, window_bounds = array<i64: 1152, 128>}, {transform_indices = @transform_2, window_bounds = array<i64: 256, 128>}, {pipeline_mode = #tpu.pipeline_mode<synchronous>, transform_indices = @transform_3, window_bounds = array<i64: 2, 128>}]} {
    %c0 = arith.constant 0 : index
    %c0_0 = arith.constant 0 : index
    %0 = vector.load %arg1[%c0, %c0_0] : memref<256x1152xbf16, #tpu.memory_space<vmem>>, vector<256x1152xbf16>
    %c0_1 = arith.constant 0 : index
    %c0_2 = arith.constant 0 : index
    %1 = vector.load %arg2[%c0_1, %c0_2] : memref<1152x128xbf16, #tpu.memory_space<vmem>>, vector<1152x128xbf16>
    %cst = arith.constant dense<0.000000e+00> : vector<256x128xf32>
    %2 = tpu.matmul %0, %1, %cst {dimension_numbers = #tpu.dot_dimension_numbers<[1], [0], [0], [1], [0, 0, 1, 1], [], []>} : vector<256x1152xbf16>, vector<1152x128xbf16>, vector<256x128xf32> -> vector<256x128xf32>
    %c0_3 = arith.constant 0 : index
    %c0_4 = arith.constant 0 : index
    %3 = vector.load %arg3[%c0_3, %c0_4] : memref<256x128xf32, #tpu.memory_space<vmem>>, vector<256x128xf32>
    tpu.vector_store %arg3[%c0_3, %c0_4], %2 {strides = array<i32>} : memref<256x128xf32, #tpu.memory_space<vmem>>, vector<256x128xf32>,
    %c0_i32 = arith.constant 0 : i32
    %4 = arith.cmpi eq, %arg0, %c0_i32 : i32
    %5 = arith.extui %4 : i1 to i32
    %c0_i32_5 = arith.constant 0 : i32
    %6 = arith.cmpi ne, %5, %c0_i32_5 : i32
    scf.if %6 {
      %cst_12 = arith.constant 0.000000e+00 : f32
      %16 = vector.broadcast %cst_12 : f32 to vector<2x128xf32>
      %c0_13 = arith.constant 0 : index
      %c0_14 = arith.constant 0 : index
      %17 = vector.load %arg4[%c0_13, %c0_14] : memref<2x128xf32, #tpu.memory_space<vmem>>, vector<2x128xf32>
      tpu.vector_store %arg4[%c0_13, %c0_14], %16 {strides = array<i32>} : memref<2x128xf32, #tpu.memory_space<vmem>>, vector<2x128xf32>,
    } else {
    }
    %cst_6 = arith.constant dense<0.000000e+00> : vector<128xf32>
    %7 = vector.multi_reduction <add>, %2, %cst_6 [0] : vector<256x128xf32> to vector<128xf32>
    %8 = vector.shape_cast %7 : vector<128xf32> to vector<1x128xf32>
    %9 = arith.mulf %2, %2 : vector<256x128xf32>
    %cst_7 = arith.constant dense<0.000000e+00> : vector<128xf32>
    %10 = vector.multi_reduction <add>, %9, %cst_7 [0] : vector<256x128xf32> to vector<128xf32>
    %11 = vector.shape_cast %10 : vector<128xf32> to vector<1x128xf32>
    %c0_8 = arith.constant 0 : index
    %c0_9 = arith.constant 0 : index
    %12 = vector.load %arg4[%c0_8, %c0_9] : memref<2x128xf32, #tpu.memory_space<vmem>>, vector<2x128xf32>
    %13 = tpu.concatenate %8, %11 in 0 : vector<1x128xf32>, vector<1x128xf32> -> vector<2x128xf32>
    %14 = arith.addf %12, %13 : vector<2x128xf32>
    %c0_10 = arith.constant 0 : index
    %c0_11 = arith.constant 0 : index
    %15 = vector.load %arg4[%c0_10, %c0_11] : memref<2x128xf32, #tpu.memory_space<vmem>>, vector<2x128xf32>
    tpu.vector_store %arg4[%c0_10, %c0_11], %14 {strides = array<i32>} : memref<2x128xf32, #tpu.memory_space<vmem>>, vector<2x128xf32>,
    return
  }
  func.func @transform_0(%arg0: i32) -> (i32, i32) {
    %c0_i32 = arith.constant 0 : i32
    %c0_i32_0 = arith.constant 0 : i32
    return %arg0, %c0_i32 : i32, i32
  }
  func.func @transform_1(%arg0: i32) -> (i32, i32) {
    %c0_i32 = arith.constant 0 : i32
    %c0_i32_0 = arith.constant 0 : i32
    %c0_i32_1 = arith.constant 0 : i32
    return %c0_i32, %c0_i32_0 : i32, i32
  }
  func.func @transform_2(%arg0: i32) -> (i32, i32) {
    %c0_i32 = arith.constant 0 : i32
    %c0_i32_0 = arith.constant 0 : i32
    return %arg0, %c0_i32 : i32, i32
  }
  func.func @transform_3(%arg0: i32) -> (i32, i32) {
    %c0_i32 = arith.constant 0 : i32
    %c0_i32_0 = arith.constant 0 : i32
    %c0_i32_1 = arith.constant 0 : i32
    return %c0_i32, %c0_i32_0 : i32, i32
  }
}

module attributes {stable_mosaic.version = 11 : i64} {
  func.func @bn_relu_conv2_kernel(%arg0: i32, %arg1: memref<256x128xf32, #tpu.memory_space<vmem>>, %arg2: memref<2x128xf32, #tpu.memory_space<vmem>>, %arg3: memref<1x128xf32, #tpu.memory_space<vmem>>, %arg4: memref<1x128xf32, #tpu.memory_space<vmem>>, %arg5: memref<128x128xbf16, #tpu.memory_space<vmem>>, %arg6: memref<256x128xf32, #tpu.memory_space<vmem>>) attributes {dimension_semantics = [#tpu.dimension_semantics<parallel>], iteration_bounds = array<i64: 4>, scalar_prefetch = 0 : i64, scratch_operands = 0 : i64, tpu.core_type = #tpu.core_type<tc>, window_params = [{transform_indices = @transform_0, window_bounds = array<i64: 256, 128>}, {pipeline_mode = #tpu.pipeline_mode<synchronous>, transform_indices = @transform_1, window_bounds = array<i64: 2, 128>}, {pipeline_mode = #tpu.pipeline_mode<synchronous>, transform_indices = @transform_2, window_bounds = array<i64: 1, 128>}, {pipeline_mode = #tpu.pipeline_mode<synchronous>, transform_indices = @transform_3, window_bounds = array<i64: 1, 128>}, {pipeline_mode = #tpu.pipeline_mode<synchronous>, transform_indices = @transform_4, window_bounds = array<i64: 128, 128>}, {transform_indices = @transform_5, window_bounds = array<i64: 256, 128>}]} {
    %c0 = arith.constant 0 : index
    %c0_0 = arith.constant 0 : index
    %0 = vector.load %arg2[%c0, %c0_0] : memref<2x128xf32, #tpu.memory_space<vmem>>, vector<1x128xf32>
    %cst = arith.constant 9.765625E-4 : f32
    %1 = vector.broadcast %cst : f32 to vector<1x128xf32>
    %2 = arith.mulf %0, %1 : vector<1x128xf32>
    %c1 = arith.constant 1 : index
    %c0_1 = arith.constant 0 : index
    %3 = vector.load %arg2[%c1, %c0_1] : memref<2x128xf32, #tpu.memory_space<vmem>>, vector<1x128xf32>
    %cst_2 = arith.constant 9.765625E-4 : f32
    %4 = vector.broadcast %cst_2 : f32 to vector<1x128xf32>
    %5 = arith.mulf %3, %4 : vector<1x128xf32>
    %6 = arith.mulf %2, %2 : vector<1x128xf32>
    %7 = arith.subf %5, %6 : vector<1x128xf32>
    %c0_3 = arith.constant 0 : index
    %c0_4 = arith.constant 0 : index
    %8 = vector.load %arg3[%c0_3, %c0_4] : memref<1x128xf32, #tpu.memory_space<vmem>>, vector<1x128xf32>
    %cst_5 = arith.constant 9.99999974E-6 : f32
    %9 = vector.broadcast %cst_5 : f32 to vector<1x128xf32>
    %10 = arith.addf %7, %9 : vector<1x128xf32>
    %11 = math.rsqrt %10 : vector<1x128xf32>
    %12 = arith.mulf %8, %11 : vector<1x128xf32>
    %c0_6 = arith.constant 0 : index
    %c0_7 = arith.constant 0 : index
    %13 = vector.load %arg4[%c0_6, %c0_7] : memref<1x128xf32, #tpu.memory_space<vmem>>, vector<1x128xf32>
    %14 = arith.mulf %2, %12 : vector<1x128xf32>
    %15 = arith.subf %13, %14 : vector<1x128xf32>
    %c0_8 = arith.constant 0 : index
    %c0_9 = arith.constant 0 : index
    %16 = vector.load %arg1[%c0_8, %c0_9] : memref<256x128xf32, #tpu.memory_space<vmem>>, vector<256x128xf32>
    %17 = vector.broadcast %12 : vector<1x128xf32> to vector<256x128xf32>
    %18 = arith.mulf %16, %17 : vector<256x128xf32>
    %19 = vector.broadcast %15 : vector<1x128xf32> to vector<256x128xf32>
    %20 = arith.addf %18, %19 : vector<256x128xf32>
    %cst_10 = arith.constant 0.000000e+00 : f32
    %21 = vector.broadcast %cst_10 : f32 to vector<256x128xf32>
    %22 = arith.maximumf %20, %21 : vector<256x128xf32>
    %23 = arith.truncf %22 : vector<256x128xf32> to vector<256x128xbf16>
    %c0_11 = arith.constant 0 : index
    %c0_12 = arith.constant 0 : index
    %24 = vector.load %arg5[%c0_11, %c0_12] : memref<128x128xbf16, #tpu.memory_space<vmem>>, vector<128x128xbf16>
    %cst_13 = arith.constant dense<0.000000e+00> : vector<256x128xf32>
    %25 = tpu.matmul %23, %24, %cst_13 {dimension_numbers = #tpu.dot_dimension_numbers<[1], [0], [0], [1], [0, 0, 1, 1], [], []>} : vector<256x128xbf16>, vector<128x128xbf16>, vector<256x128xf32> -> vector<256x128xf32>
    %c0_14 = arith.constant 0 : index
    %c0_15 = arith.constant 0 : index
    %26 = vector.load %arg6[%c0_14, %c0_15] : memref<256x128xf32, #tpu.memory_space<vmem>>, vector<256x128xf32>
    tpu.vector_store %arg6[%c0_14, %c0_15], %25 {strides = array<i32>} : memref<256x128xf32, #tpu.memory_space<vmem>>, vector<256x128xf32>,
    return
  }
  func.func @transform_0(%arg0: i32) -> (i32, i32) {
    %c0_i32 = arith.constant 0 : i32
    %c0_i32_0 = arith.constant 0 : i32
    return %arg0, %c0_i32 : i32, i32
  }
  func.func @transform_1(%arg0: i32) -> (i32, i32) {
    %c0_i32 = arith.constant 0 : i32
    %c0_i32_0 = arith.constant 0 : i32
    %c0_i32_1 = arith.constant 0 : i32
    return %c0_i32, %c0_i32_0 : i32, i32
  }
  func.func @transform_2(%arg0: i32) -> (i32, i32) {
    %c0_i32 = arith.constant 0 : i32
    %c0_i32_0 = arith.constant 0 : i32
    %c0_i32_1 = arith.constant 0 : i32
    return %c0_i32, %c0_i32_0 : i32, i32
  }
  func.func @transform_3(%arg0: i32) -> (i32, i32) {
    %c0_i32 = arith.constant 0 : i32
    %c0_i32_0 = arith.constant 0 : i32
    %c0_i32_1 = arith.constant 0 : i32
    return %c0_i32, %c0_i32_0 : i32, i32
  }
  func.func @transform_4(%arg0: i32) -> (i32, i32) {
    %c0_i32 = arith.constant 0 : i32
    %c0_i32_0 = arith.constant 0 : i32
    %c0_i32_1 = arith.constant 0 : i32
    return %c0_i32, %c0_i32_0 : i32, i32
  }
  func.func @transform_5(%arg0: i32) -> (i32, i32) {
    %c0_i32 = arith.constant 0 : i32
    %c0_i32_0 = arith.constant 0 : i32
    return %arg0, %c0_i32 : i32, i32
  }
}

</mosaic_0001>

<llo_original>
// kernel: c5_head_forward.2
$region0: #{c5_head_forward.2}
  #allocation0 [shape = 'u32[]', space=smem, size = 0x4, offset = 0x4, fixed_abs, tag = 'smem constant byte address 0x4 - core index']
  #allocation1 [shape = 'u32[144,128]{1,0:T(1,128)}', space=vmem, size = 0x12000, scoped, tag = 'internal scratch']
  %s0 = inlined_call_operand.vmem [shape: bf16[1024,1152], index: 0, kind: input, shape index: {}]
  %s1 = inlined_call_operand.vmem [shape: bf16[1152,128], index: 1, kind: input, shape index: {}]
  %s2 = inlined_call_operand.vmem [shape: f32[1024,128], index: 2, kind: output, shape index: {0}]
  %s3 = inlined_call_operand.vmem [shape: f32[2,128], index: 3, kind: output, shape index: {1}]
  %4 = xla_tuple %s2, %s3
  %s5 = sld [smem:[#allocation0]]
  $region53: #{c5_head_forward.2} parent=0
    _
  %s7 = ssub.s32 1, %s5
  %s8 = scalar_select 0, %s7, %s5
  loop: start=0, step=1, limit=6
  $region2: #{c5_head_forward.2} parent=0 // loop_pre_header
    _
  $region3: #{c5_head_forward.2} parent=0 // loop_header
    %s10 = sphi 0, %s14
    %p11 = scmp.ge.s32.totalorder %s10, 6
    %s20 = sphi 0, %s22
    %s23 = sphi 0, %s20
    %s24 = sphi 0, %s23
    %s40 = sphi 0, %s24
    %s44 = sphi 0, %s44
    %s46 = sphi 0, %s44
    %s47 = sphi 0, %s46
    %s61 = sphi 0, %s47
    %s67 = sphi 0, %s69
    %s70 = sphi 0, %s67
    %s71 = sphi 0, %s70
    %s87 = sphi 0, %s71
    %s91 = sphi 0, %s91
    %s93 = sphi 0, %s91
    %s94 = sphi 0, %s93
    %s108 = sphi 0, %s94
  $region4: #{c5_head_forward.2} parent=0 // loop_header_branch
    %13 = sbr.rel (%p11) target = $region8
  $region5: #{c5_head_forward.2} parent=0 // loop_body
    %s15 = ssub.s32 %s10, 1
    %s16 = ssub.s32 %s10, 2
    %s17 = sadd.s32 %s10, 1
    %s18 = ssub.s32 %s10, %s17
    %p19 = scmp.eq.s32.totalorder %s18, 0
    %s21 = sadd.s32 %s20, 1
    %s22 = scalar_select %p19, %s20, %s21
    %p25 = pneg %p19
    %p26 = scmp.eq.s32.totalorder %s10, 3
    %p27 = por %p25, %p26
    %p28 = scmp.ne.s32.totalorder %s20, %s23
    %p29 = scmp.eq.s32.totalorder %s10, 0
    %p30 = por %p28, %p29
    %p31 = scmp.ne.s32.totalorder %s20, %s23
    %p32 = scmp.eq.s32.totalorder %s15, 3
    %p33 = por %p31, %p32
    %p34 = scmp.ne.s32.totalorder %s23, %s24
    %p35 = scmp.eq.s32.totalorder %s15, 0
    %p36 = por %p34, %p35
    %p37 = scmp.ne.s32.totalorder %s23, %s24
    %p38 = scmp.eq.s32.totalorder %s16, 3
    %p39 = por %p37, %p38
    %p41 = scmp.ne.s32.totalorder %s24, %s40
    %p42 = scmp.eq.s32.totalorder %s16, 0
    %p43 = por %p41, %p42
    %s45 = sadd.s32 %s44, 1
    %p48 = scmp.eq.s32.totalorder %s10, 3
    %p49 = scmp.ne.s32.totalorder %s44, %s46
    %p50 = scmp.eq.s32.totalorder %s10, 0
    %p51 = por %p49, %p50
    %p52 = scmp.ne.s32.totalorder %s44, %s46
    %p53 = scmp.eq.s32.totalorder %s15, 3
    %p54 = por %p52, %p53
    %p55 = scmp.ne.s32.totalorder %s46, %s47
    %p56 = scmp.eq.s32.totalorder %s15, 0
    %p57 = por %p55, %p56
    %p58 = scmp.ne.s32.totalorder %s46, %s47
    %p59 = scmp.eq.s32.totalorder %s16, 3
    %p60 = por %p58, %p59
    %p62 = scmp.ne.s32.totalorder %s47, %s61
    %p63 = scmp.eq.s32.totalorder %s16, 0
    %p64 = por %p62, %p63
    %s65 = ssub.s32 %s10, %s17
    %p66 = scmp.eq.s32.totalorder %s65, 0
    %s68 = sadd.s32 %s67, 1
    %s69 = scalar_select %p66, %s67, %s68
    %p72 = pneg %p66
    %p73 = scmp.eq.s32.totalorder %s10, 3
    %p74 = por %p72, %p73
    %p75 = scmp.ne.s32.totalorder %s67, %s70
    %p76 = scmp.eq.s32.totalorder %s10, 0
    %p77 = por %p75, %p76
    %p78 = scmp.ne.s32.totalorder %s67, %s70
    %p79 = scmp.eq.s32.totalorder %s15, 3
    %p80 = por %p78, %p79
    %p81 = scmp.ne.s32.totalorder %s70, %s71
    %p82 = scmp.eq.s32.totalorder %s15, 0
    %p83 = por %p81, %p82
    %p84 = scmp.ne.s32.totalorder %s70, %s71
    %p85 = scmp.eq.s32.totalorder %s16, 3
    %p86 = por %p84, %p85
    %p88 = scmp.ne.s32.totalorder %s71, %s87
    %p89 = scmp.eq.s32.totalorder %s16, 0
    %p90 = por %p88, %p89
    %s92 = sadd.s32 %s91, 1
    %p95 = scmp.eq.s32.totalorder %s10, 3
    %p96 = scmp.ne.s32.totalorder %s91, %s93
    %p97 = scmp.eq.s32.totalorder %s10, 0
    %p98 = por %p96, %p97
    %p99 = scmp.ne.s32.totalorder %s91, %s93
    %p100 = scmp.eq.s32.totalorder %s15, 3
    %p101 = por %p99, %p100
    %p102 = scmp.ne.s32.totalorder %s93, %s94
    %p103 = scmp.eq.s32.totalorder %s15, 0
    %p104 = por %p102, %p103
    %p105 = scmp.ne.s32.totalorder %s93, %s94
    %p106 = scmp.eq.s32.totalorder %s16, 3
    %p107 = por %p105, %p106
    %p109 = scmp.ne.s32.totalorder %s94, %s108
    %p110 = scmp.eq.s32.totalorder %s16, 0
    %p111 = por %p109, %p110
    %p112 = scmp.le.s32.totalorder 1, %s10
    %p113 = scmp.lt.s32.totalorder %s10, 5
    %p114 = pnand %p112, %p113
    %p115 = pneg %p114
    // Predicated region
    $region9: #{c5_head_forward.2} parent=5 // pred_check
      _
    $region10: #{c5_head_forward.2} parent=5 // pred_check_branch
      %117 = sbr.rel (%p114) target = $region12
    $region11: #{c5_head_forward.2} parent=5 // pred_region
      %s118 = ssub.s32 %s10, 1
      // Predicated region
      $region13: #{c5_head_forward.2} parent=11 // pred_check
        %p119 = pneg %p57
      $region14: #{c5_head_forward.2} parent=11 // pred_check_branch
        %121 = sbr.rel (%p119) target = $region16
      $region15: #{c5_head_forward.2} parent=11 // pred_region
        _
      $region16: #{c5_head_forward.2} parent=11 // pred_fallthru
        _
    $region12: #{c5_head_forward.2} parent=5 // pred_fallthru
      _
    %p122 = scmp.lt.s32.totalorder %s10, 4
    // Predicated region
    $region17: #{c5_head_forward.2} parent=5 // pred_check
      %p123 = pneg %p122
    $region18: #{c5_head_forward.2} parent=5 // pred_check_branch
      %125 = sbr.rel (%p123) target = $region20
    $region19: #{c5_head_forward.2} parent=5 // pred_region
      // Predicated region
      $region21: #{c5_head_forward.2} parent=19 // pred_check
        %p126 = pneg %p30
      $region22: #{c5_head_forward.2} parent=19 // pred_check_branch
        %128 = sbr.rel (%p126) target = $region24
      $region23: #{c5_head_forward.2} parent=19 // pred_region
        %s129 = smul.u32 32, %s10
        %p130 = scmp.lt.s32.totalorder %s129, 127
        %s131 = scalar_select %p130, %s129, 127
        %s132 = smul.addr %s131, 9
        %s133 = smul.addr %s132, 4
        %s134 = scalar_lea.vmem %s0, %s133
        %s135 = smul.u32 32, %s10
      $region24: #{c5_head_forward.2} parent=19 // pred_fallthru
        _
    $region20: #{c5_head_forward.2} parent=5 // pred_fallthru
      _
    %p136 = scmp.le.s32.totalorder 1, %s10
    %p137 = scmp.lt.s32.totalorder %s10, 5
    %p138 = pnand %p136, %p137
    %p139 = pneg %p138
    // Predicated region
    $region25: #{c5_head_forward.2} parent=5 // pred_check
      _
    $region26: #{c5_head_forward.2} parent=5 // pred_check_branch
      %141 = sbr.rel (%p138) target = $region28
    $region27: #{c5_head_forward.2} parent=5 // pred_region
      %s142 = ssub.s32 %s10, 1
      %s143 = smul.u32 32, %s15
      %p144 = scmp.lt.s32.totalorder %s143, 127
      %s145 = scalar_select %p144, %s143, 127
      %s146 = smul.addr %s145, 9
      %s147 = smul.addr %s146, 4
      %s148 = scalar_lea.vmem %s0, %s147
      %p149 = pneg %p36
      %p150 = pneg %p33
      %p151 = pneg %p57
      %p152 = pneg %p54
      %p153 = pneg %p83
      %p154 = pneg %p80
      %s155 = smul.u32 32, %s15
      %p156 = scmp.lt.s32.totalorder %s155, 127
      %s157 = scalar_select %p156, %s155, 127
      %s158 = smul.addr %s157, 8
      %s159 = scalar_lea.vmem %s2, %s158
      %p160 = pneg %p104
      %p161 = pneg %p101
      %s162 = smul.u32 32, %s15
      %p163 = scmp.lt.s32.totalorder %s162, 127
      %s164 = scalar_select %p163, %s162, 127
      %s165 = smul.addr %s164, 9
      %s166 = smul.addr %s165, 4
      %s167 = scalar_lea.vmem %s0, %s166
      %s168 = smul.u32 32, %s15
      %s169 = smul.u32 32, %s15
      %p170 = scmp.lt.s32.totalorder %s169, 127
      %s171 = scalar_select %p170, %s169, 127
      %s172 = smul.addr %s171, 8
      %s173 = scalar_lea.vmem %s2, %s172
      %s174 = smul.u32 32, %s15
      %v176 = vld [vmem:[%s167] sm:$0xff]
      %v177 = vld [vmem:[%s167 + $0x8] sm:$0xff]
      %v178 = vld [vmem:[%s167 + $0x10] sm:$0xff]
      %v179 = vld [vmem:[%s167 + $0x18] sm:$0xff]
      %v180 = vld [vmem:[%s167 + $0x20] sm:$0xf]
      %v181 = vld [vmem:[%s167 + $0x24] sm:$0xff]
      %v182 = vld [vmem:[%s167 + $0x2c] sm:$0xff]
      %v183 = vld [vmem:[%s167 + $0x34] sm:$0xff]
      %v184 = vld [vmem:[%s167 + $0x3c] sm:$0xff]
      %v185 = vld [vmem:[%s167 + $0x44] sm:$0xf]
      %v186 = vld [vmem:[%s167 + $0x48] sm:$0xff]
      %v187 = vld [vmem:[%s167 + $0x50] sm:$0xff]
      %v188 = vld [vmem:[%s167 + $0x58] sm:$0xff]
      %v189 = vld [vmem:[%s167 + $0x60] sm:$0xff]
      %v190 = vld [vmem:[%s167 + $0x68] sm:$0xf]
      %v191 = vld [vmem:[%s167 + $0x6c] sm:$0xff]
      %v192 = vld [vmem:[%s167 + $0x74] sm:$0xff]
      %v193 = vld [vmem:[%s167 + $0x7c] sm:$0xff]
      %v194 = vld [vmem:[%s167 + $0x84] sm:$0xff]
      %v195 = vld [vmem:[%s167 + $0x8c] sm:$0xf]
      %v196 = vld [vmem:[%s167 + $0x90] sm:$0xff]
      %v197 = vld [vmem:[%s167 + $0x98] sm:$0xff]
      %v198 = vld [vmem:[%s167 + $0xa0] sm:$0xff]
      %v199 = vld [vmem:[%s167 + $0xa8] sm:$0xff]
      %v200 = vld [vmem:[%s167 + $0xb0] sm:$0xf]
      %v201 = vld [vmem:[%s167 + $0xb4] sm:$0xff]
      %v202 = vld [vmem:[%s167 + $0xbc] sm:$0xff]
      %v203 = vld [vmem:[%s167 + $0xc4] sm:$0xff]
      %v204 = vld [vmem:[%s167 + $0xcc] sm:$0xff]
      %v205 = vld [vmem:[%s167 + $0xd4] sm:$0xf]
      %v206 = vld [vmem:[%s167 + $0xd8] sm:$0xff]
      %v207 = vld [vmem:[%s167 + $0xe0] sm:$0xff]
      %v208 = vld [vmem:[%s167 + $0xe8] sm:$0xff]
      %v209 = vld [vmem:[%s167 + $0xf0] sm:$0xff]
      %v210 = vld [vmem:[%s167 + $0xf8] sm:$0xf]
      %v211 = vld [vmem:[%s167 + $0xfc] sm:$0xff]
      %v212 = vld [vmem:[%s167 + $0x104] sm:$0xff]
      %v213 = vld [vmem:[%s167 + $0x10c] sm:$0xff]
      %v214 = vld [vmem:[%s167 + $0x114] sm:$0xff]
      %v215 = vld [vmem:[%s167 + $0x11c] sm:$0xf]
      %v216 = vld [vmem:[%s167 + $0x120] sm:$0xff]
      %v217 = vld [vmem:[%s167 + $0x128] sm:$0xff]
      %v218 = vld [vmem:[%s167 + $0x130] sm:$0xff]
      %v219 = vld [vmem:[%s167 + $0x138] sm:$0xff]
      %v220 = vld [vmem:[%s167 + $0x140] sm:$0xf]
      %v221 = vld [vmem:[%s167 + $0x144] sm:$0xff]
      %v222 = vld [vmem:[%s167 + $0x14c] sm:$0xff]
      %v223 = vld [vmem:[%s167 + $0x154] sm:$0xff]
      %v224 = vld [vmem:[%s167 + $0x15c] sm:$0xff]
      %v225 = vld [vmem:[%s167 + $0x164] sm:$0xf]
      %v226 = vld [vmem:[%s167 + $0x168] sm:$0xff]
      %v227 = vld [vmem:[%s167 + $0x170] sm:$0xff]
      %v228 = vld [vmem:[%s167 + $0x178] sm:$0xff]
      %v229 = vld [vmem:[%s167 + $0x180] sm:$0xff]
      %v230 = vld [vmem:[%s167 + $0x188] sm:$0xf]
      %v231 = vld [vmem:[%s167 + $0x18c] sm:$0xff]
      %v232 = vld [vmem:[%s167 + $0x194] sm:$0xff]
      %v233 = vld [vmem:[%s167 + $0x19c] sm:$0xff]
      %v234 = vld [vmem:[%s167 + $0x1a4] sm:$0xff]
      %v235 = vld [vmem:[%s167 + $0x1ac] sm:$0xf]
      %v236 = vld [vmem:[%s167 + $0x1b0] sm:$0xff]
      %v237 = vld [vmem:[%s167 + $0x1b8] sm:$0xff]
      %v238 = vld [vmem:[%s167 + $0x1c0] sm:$0xff]
      %v239 = vld [vmem:[%s167 + $0x1c8] sm:$0xff]
      %v240 = vld [vmem:[%s167 + $0x1d0] sm:$0xf]
      %v241 = vld [vmem:[%s167 + $0x1d4] sm:$0xff]
      %v242 = vld [vmem:[%s167 + $0x1dc] sm:$0xff]
      %v243 = vld [vmem:[%s167 + $0x1e4] sm:$0xff]
      %v244 = vld [vmem:[%s167 + $0x1ec] sm:$0xff]
      %v245 = vld [vmem:[%s167 + $0x1f4] sm:$0xf]
      %v246 = vld [vmem:[%s167 + $0x1f8] sm:$0xff]
      %v247 = vld [vmem:[%s167 + $0x200] sm:$0xff]
      %v248 = vld [vmem:[%s167 + $0x208] sm:$0xff]
      %v249 = vld [vmem:[%s167 + $0x210] sm:$0xff]
      %v250 = vld [vmem:[%s167 + $0x218] sm:$0xf]
      %v251 = vld [vmem:[%s167 + $0x21c] sm:$0xff]
      %v252 = vld [vmem:[%s167 + $0x224] sm:$0xff]
      %v253 = vld [vmem:[%s167 + $0x22c] sm:$0xff]
      %v254 = vld [vmem:[%s167 + $0x234] sm:$0xff]
      %v255 = vld [vmem:[%s167 + $0x23c] sm:$0xf]
      %v256 = vld [vmem:[%s167 + $0x240] sm:$0xff]
      %v257 = vld [vmem:[%s167 + $0x248] sm:$0xff]
      %v258 = vld [vmem:[%s167 + $0x250] sm:$0xff]
      %v259 = vld [vmem:[%s167 + $0x258] sm:$0xff]
      %v260 = vld [vmem:[%s167 + $0x260] sm:$0xf]
      %v261 = vld [vmem:[%s167 + $0x264] sm:$0xff]
      %v262 = vld [vmem:[%s167 + $0x26c] sm:$0xff]
      %v263 = vld [vmem:[%s167 + $0x274] sm:$0xff]
      %v264 = vld [vmem:[%s167 + $0x27c] sm:$0xff]
      %v265 = vld [vmem:[%s167 + $0x284] sm:$0xf]
      %v266 = vld [vmem:[%s167 + $0x288] sm:$0xff]
      %v267 = vld [vmem:[%s167 + $0x290] sm:$0xff]
      %v268 = vld [vmem:[%s167 + $0x298] sm:$0xff]
      %v269 = vld [vmem:[%s167 + $0x2a0] sm:$0xff]
      %v270 = vld [vmem:[%s167 + $0x2a8] sm:$0xf]
      %v271 = vld [vmem:[%s167 + $0x2ac] sm:$0xff]
      %v272 = vld [vmem:[%s167 + $0x2b4] sm:$0xff]
      %v273 = vld [vmem:[%s167 + $0x2bc] sm:$0xff]
      %v274 = vld [vmem:[%s167 + $0x2c4] sm:$0xff]
      %v275 = vld [vmem:[%s167 + $0x2cc] sm:$0xf]
      %v276 = vld [vmem:[%s167 + $0x2d0] sm:$0xff]
      %v277 = vld [vmem:[%s167 + $0x2d8] sm:$0xff]
      %v278 = vld [vmem:[%s167 + $0x2e0] sm:$0xff]
      %v279 = vld [vmem:[%s167 + $0x2e8] sm:$0xff]
      %v280 = vld [vmem:[%s167 + $0x2f0] sm:$0xf]
      %v281 = vld [vmem:[%s167 + $0x2f4] sm:$0xff]
      %v282 = vld [vmem:[%s167 + $0x2fc] sm:$0xff]
      %v283 = vld [vmem:[%s167 + $0x304] sm:$0xff]
      %v284 = vld [vmem:[%s167 + $0x30c] sm:$0xff]
      %v285 = vld [vmem:[%s167 + $0x314] sm:$0xf]
      %v286 = vld [vmem:[%s167 + $0x318] sm:$0xff]
      %v287 = vld [vmem:[%s167 + $0x320] sm:$0xff]
      %v288 = vld [vmem:[%s167 + $0x328] sm:$0xff]
      %v289 = vld [vmem:[%s167 + $0x330] sm:$0xff]
      %v290 = vld [vmem:[%s167 + $0x338] sm:$0xf]
      %v291 = vld [vmem:[%s167 + $0x33c] sm:$0xff]
      %v292 = vld [vmem:[%s167 + $0x344] sm:$0xff]
      %v293 = vld [vmem:[%s167 + $0x34c] sm:$0xff]
      %v294 = vld [vmem:[%s167 + $0x354] sm:$0xff]
      %v295 = vld [vmem:[%s167 + $0x35c] sm:$0xf]
      %v296 = vld [vmem:[%s167 + $0x360] sm:$0xff]
      %v297 = vld [vmem:[%s167 + $0x368] sm:$0xff]
      %v298 = vld [vmem:[%s167 + $0x370] sm:$0xff]
      %v299 = vld [vmem:[%s167 + $0x378] sm:$0xff]
      %v300 = vld [vmem:[%s167 + $0x380] sm:$0xf]
      %v301 = vld [vmem:[%s167 + $0x384] sm:$0xff]
      %v302 = vld [vmem:[%s167 + $0x38c] sm:$0xff]
      %v303 = vld [vmem:[%s167 + $0x394] sm:$0xff]
      %v304 = vld [vmem:[%s167 + $0x39c] sm:$0xff]
      %v305 = vld [vmem:[%s167 + $0x3a4] sm:$0xf]
      %v306 = vld [vmem:[%s167 + $0x3a8] sm:$0xff]
      %v307 = vld [vmem:[%s167 + $0x3b0] sm:$0xff]
      %v308 = vld [vmem:[%s167 + $0x3b8] sm:$0xff]
      %v309 = vld [vmem:[%s167 + $0x3c0] sm:$0xff]
      %v310 = vld [vmem:[%s167 + $0x3c8] sm:$0xf]
      %v311 = vld [vmem:[%s167 + $0x3cc] sm:$0xff]
      %v312 = vld [vmem:[%s167 + $0x3d4] sm:$0xff]
      %v313 = vld [vmem:[%s167 + $0x3dc] sm:$0xff]
      %v314 = vld [vmem:[%s167 + $0x3e4] sm:$0xff]
      %v315 = vld [vmem:[%s167 + $0x3ec] sm:$0xf]
      %v316 = vld [vmem:[%s167 + $0x3f0] sm:$0xff]
      %v317 = vld [vmem:[%s167 + $0x3f8] sm:$0xff]
      %v318 = vld [vmem:[%s167 + $0x400] sm:$0xff]
      %v319 = vld [vmem:[%s167 + $0x408] sm:$0xff]
      %v320 = vld [vmem:[%s167 + $0x410] sm:$0xf]
      %v321 = vld [vmem:[%s167 + $0x414] sm:$0xff]
      %v322 = vld [vmem:[%s167 + $0x41c] sm:$0xff]
      %v323 = vld [vmem:[%s167 + $0x424] sm:$0xff]
      %v324 = vld [vmem:[%s167 + $0x42c] sm:$0xff]
      %v325 = vld [vmem:[%s167 + $0x434] sm:$0xf]
      %v326 = vld [vmem:[%s167 + $0x438] sm:$0xff]
      %v327 = vld [vmem:[%s167 + $0x440] sm:$0xff]
      %v328 = vld [vmem:[%s167 + $0x448] sm:$0xff]
      %v329 = vld [vmem:[%s167 + $0x450] sm:$0xff]
      %v330 = vld [vmem:[%s167 + $0x458] sm:$0xf]
      %v331 = vld [vmem:[%s167 + $0x45c] sm:$0xff]
      %v332 = vld [vmem:[%s167 + $0x464] sm:$0xff]
      %v333 = vld [vmem:[%s167 + $0x46c] sm:$0xff]
      %v334 = vld [vmem:[%s167 + $0x474] sm:$0xff]
      %v335 = vld [vmem:[%s167 + $0x47c] sm:$0xf]
      %v336 = vld [vmem:[%s1] sm:$0xf]
      %v337 = vld [vmem:[%s1 + $0x4] sm:$0xf]
      %v338 = vld [vmem:[%s1 + $0x8] sm:$0xf]
      %v339 = vld [vmem:[%s1 + $0xc] sm:$0xf]
      %v340 = vld [vmem:[%s1 + $0x10] sm:$0xf]
      %v341 = vld [vmem:[%s1 + $0x14] sm:$0xf]
      %v342 = vld [vmem:[%s1 + $0x18] sm:$0xf]
      %v343 = vld [vmem:[%s1 + $0x1c] sm:$0xf]
      %v344 = vld [vmem:[%s1 + $0x20] sm:$0xf]
      %v345 = vld [vmem:[%s1 + $0x24] sm:$0xf]
      %v346 = vld [vmem:[%s1 + $0x28] sm:$0xf]
      %v347 = vld [vmem:[%s1 + $0x2c] sm:$0xf]
      %v348 = vld [vmem:[%s1 + $0x30] sm:$0xf]
      %v349 = vld [vmem:[%s1 + $0x34] sm:$0xf]
      %v350 = vld [vmem:[%s1 + $0x38] sm:$0xf]
      %v351 = vld [vmem:[%s1 + $0x3c] sm:$0xf]
      %v352 = vld [vmem:[%s1 + $0x40] sm:$0xf]
      %v353 = vld [vmem:[%s1 + $0x44] sm:$0xf]
      %v354 = vld [vmem:[%s1 + $0x48] sm:$0xf]
      %v355 = vld [vmem:[%s1 + $0x4c] sm:$0xf]
      %v356 = vld [vmem:[%s1 + $0x50] sm:$0xf]
      %v357 = vld [vmem:[%s1 + $0x54] sm:$0xf]
      %v358 = vld [vmem:[%s1 + $0x58] sm:$0xf]
      %v359 = vld [vmem:[%s1 + $0x5c] sm:$0xf]
      %v360 = vld [vmem:[%s1 + $0x60] sm:$0xf]
      %v361 = vld [vmem:[%s1 + $0x64] sm:$0xf]
      %v362 = vld [vmem:[%s1 + $0x68] sm:$0xf]
      %v363 = vld [vmem:[%s1 + $0x6c] sm:$0xf]
      %v364 = vld [vmem:[%s1 + $0x70] sm:$0xf]
      %v365 = vld [vmem:[%s1 + $0x74] sm:$0xf]
      %v366 = vld [vmem:[%s1 + $0x78] sm:$0xf]
      %v367 = vld [vmem:[%s1 + $0x7c] sm:$0xf]
      %v368 = vld [vmem:[%s1 + $0x80] sm:$0xf]
      %v369 = vld [vmem:[%s1 + $0x84] sm:$0xf]
      %v370 = vld [vmem:[%s1 + $0x88] sm:$0xf]
      %v371 = vld [vmem:[%s1 + $0x8c] sm:$0xf]
      %v372 = vld [vmem:[%s1 + $0x90] sm:$0xf]
      %v373 = vld [vmem:[%s1 + $0x94] sm:$0xf]
      %v374 = vld [vmem:[%s1 + $0x98] sm:$0xf]
      %v375 = vld [vmem:[%s1 + $0x9c] sm:$0xf]
      %v376 = vld [vmem:[%s1 + $0xa0] sm:$0xf]
      %v377 = vld [vmem:[%s1 + $0xa4] sm:$0xf]
      %v378 = vld [vmem:[%s1 + $0xa8] sm:$0xf]
      %v379 = vld [vmem:[%s1 + $0xac] sm:$0xf]
      %v380 = vld [vmem:[%s1 + $0xb0] sm:$0xf]
      %v381 = vld [vmem:[%s1 + $0xb4] sm:$0xf]
      %v382 = vld [vmem:[%s1 + $0xb8] sm:$0xf]
      %v383 = vld [vmem:[%s1 + $0xbc] sm:$0xf]
      %v384 = vld [vmem:[%s1 + $0xc0] sm:$0xf]
      %v385 = vld [vmem:[%s1 + $0xc4] sm:$0xf]
      %v386 = vld [vmem:[%s1 + $0xc8] sm:$0xf]
      %v387 = vld [vmem:[%s1 + $0xcc] sm:$0xf]
      %v388 = vld [vmem:[%s1 + $0xd0] sm:$0xf]
      %v389 = vld [vmem:[%s1 + $0xd4] sm:$0xf]
      %v390 = vld [vmem:[%s1 + $0xd8] sm:$0xf]
      %v391 = vld [vmem:[%s1 + $0xdc] sm:$0xf]
      %v392 = vld [vmem:[%s1 + $0xe0] sm:$0xf]
      %v393 = vld [vmem:[%s1 + $0xe4] sm:$0xf]
      %v394 = vld [vmem:[%s1 + $0xe8] sm:$0xf]
      %v395 = vld [vmem:[%s1 + $0xec] sm:$0xf]
      %v396 = vld [vmem:[%s1 + $0xf0] sm:$0xf]
      %v397 = vld [vmem:[%s1 + $0xf4] sm:$0xf]
      %v398 = vld [vmem:[%s1 + $0xf8] sm:$0xf]
      %v399 = vld [vmem:[%s1 + $0xfc] sm:$0xf]
      %v400 = vld [vmem:[%s1 + $0x100] sm:$0xf]
      %v401 = vld [vmem:[%s1 + $0x104] sm:$0xf]
      %v402 = vld [vmem:[%s1 + $0x108] sm:$0xf]
      %v403 = vld [vmem:[%s1 + $0x10c] sm:$0xf]
      %v404 = vld [vmem:[%s1 + $0x110] sm:$0xf]
      %v405 = vld [vmem:[%s1 + $0x114] sm:$0xf]
      %v406 = vld [vmem:[%s1 + $0x118] sm:$0xf]
      %v407 = vld [vmem:[%s1 + $0x11c] sm:$0xf]
      %v408 = vld [vmem:[%s1 + $0x120] sm:$0xf]
      %v409 = vld [vmem:[%s1 + $0x124] sm:$0xf]
      %v410 = vld [vmem:[%s1 + $0x128] sm:$0xf]
      %v411 = vld [vmem:[%s1 + $0x12c] sm:$0xf]
      %v412 = vld [vmem:[%s1 + $0x130] sm:$0xf]
      %v413 = vld [vmem:[%s1 + $0x134] sm:$0xf]
      %v414 = vld [vmem:[%s1 + $0x138] sm:$0xf]
      %v415 = vld [vmem:[%s1 + $0x13c] sm:$0xf]
      %v416 = vld [vmem:[%s1 + $0x140] sm:$0xf]
      %v417 = vld [vmem:[%s1 + $0x144] sm:$0xf]
      %v418 = vld [vmem:[%s1 + $0x148] sm:$0xf]
      %v419 = vld [vmem:[%s1 + $0x14c] sm:$0xf]
      %v420 = vld [vmem:[%s1 + $0x150] sm:$0xf]
      %v421 = vld [vmem:[%s1 + $0x154] sm:$0xf]
      %v422 = vld [vmem:[%s1 + $0x158] sm:$0xf]
      %v423 = vld [vmem:[%s1 + $0x15c] sm:$0xf]
      %v424 = vld [vmem:[%s1 + $0x160] sm:$0xf]
      %v425 = vld [vmem:[%s1 + $0x164] sm:$0xf]
      %v426 = vld [vmem:[%s1 + $0x168] sm:$0xf]
      %v427 = vld [vmem:[%s1 + $0x16c] sm:$0xf]
      %v428 = vld [vmem:[%s1 + $0x170] sm:$0xf]
      %v429 = vld [vmem:[%s1 + $0x174] sm:$0xf]
      %v430 = vld [vmem:[%s1 + $0x178] sm:$0xf]
      %v431 = vld [vmem:[%s1 + $0x17c] sm:$0xf]
      %v432 = vld [vmem:[%s1 + $0x180] sm:$0xf]
      %v433 = vld [vmem:[%s1 + $0x184] sm:$0xf]
      %v434 = vld [vmem:[%s1 + $0x188] sm:$0xf]
      %v435 = vld [vmem:[%s1 + $0x18c] sm:$0xf]
      %v436 = vld [vmem:[%s1 + $0x190] sm:$0xf]
      %v437 = vld [vmem:[%s1 + $0x194] sm:$0xf]
      %v438 = vld [vmem:[%s1 + $0x198] sm:$0xf]
      %v439 = vld [vmem:[%s1 + $0x19c] sm:$0xf]
      %v440 = vld [vmem:[%s1 + $0x1a0] sm:$0xf]
      %v441 = vld [vmem:[%s1 + $0x1a4] sm:$0xf]
      %v442 = vld [vmem:[%s1 + $0x1a8] sm:$0xf]
      %v443 = vld [vmem:[%s1 + $0x1ac] sm:$0xf]
      %v444 = vld [vmem:[%s1 + $0x1b0] sm:$0xf]
      %v445 = vld [vmem:[%s1 + $0x1b4] sm:$0xf]
      %v446 = vld [vmem:[%s1 + $0x1b8] sm:$0xf]
      %v447 = vld [vmem:[%s1 + $0x1bc] sm:$0xf]
      %v448 = vld [vmem:[%s1 + $0x1c0] sm:$0xf]
      %v449 = vld [vmem:[%s1 + $0x1c4] sm:$0xf]
      %v450 = vld [vmem:[%s1 + $0x1c8] sm:$0xf]
      %v451 = vld [vmem:[%s1 + $0x1cc] sm:$0xf]
      %v452 = vld [vmem:[%s1 + $0x1d0] sm:$0xf]
      %v453 = vld [vmem:[%s1 + $0x1d4] sm:$0xf]
      %v454 = vld [vmem:[%s1 + $0x1d8] sm:$0xf]
      %v455 = vld [vmem:[%s1 + $0x1dc] sm:$0xf]
      %v456 = vld [vmem:[%s1 + $0x1e0] sm:$0xf]
      %v457 = vld [vmem:[%s1 + $0x1e4] sm:$0xf]
      %v458 = vld [vmem:[%s1 + $0x1e8] sm:$0xf]
      %v459 = vld [vmem:[%s1 + $0x1ec] sm:$0xf]
      %v460 = vld [vmem:[%s1 + $0x1f0] sm:$0xf]
      %v461 = vld [vmem:[%s1 + $0x1f4] sm:$0xf]
      %v462 = vld [vmem:[%s1 + $0x1f8] sm:$0xf]
      %v463 = vld [vmem:[%s1 + $0x1fc] sm:$0xf]
      %v464 = vld [vmem:[%s1 + $0x200] sm:$0xf]
      %v465 = vld [vmem:[%s1 + $0x204] sm:$0xf]
      %v466 = vld [vmem:[%s1 + $0x208] sm:$0xf]
      %v467 = vld [vmem:[%s1 + $0x20c] sm:$0xf]
      %v468 = vld [vmem:[%s1 + $0x210] sm:$0xf]
      %v469 = vld [vmem:[%s1 + $0x214] sm:$0xf]
      %v470 = vld [vmem:[%s1 + $0x218] sm:$0xf]
      %v471 = vld [vmem:[%s1 + $0x21c] sm:$0xf]
      %v472 = vld [vmem:[%s1 + $0x220] sm:$0xf]
      %v473 = vld [vmem:[%s1 + $0x224] sm:$0xf]
      %v474 = vld [vmem:[%s1 + $0x228] sm:$0xf]
      %v475 = vld [vmem:[%s1 + $0x22c] sm:$0xf]
      %v476 = vld [vmem:[%s1 + $0x230] sm:$0xf]
      %v477 = vld [vmem:[%s1 + $0x234] sm:$0xf]
      %v478 = vld [vmem:[%s1 + $0x238] sm:$0xf]
      %v479 = vld [vmem:[%s1 + $0x23c] sm:$0xf]
      %v640 = vunpack.c.l.b16 %v176
      %v641 = vunpack.c.h.b16 %v176
      %v642 = vunpack.c.l.b16 %v177
      %v643 = vunpack.c.h.b16 %v177
      %v644 = vunpack.c.l.b16 %v178
      %v645 = vunpack.c.h.b16 %v178
      %v646 = vunpack.c.l.b16 %v179
      %v647 = vunpack.c.h.b16 %v179
      %v648 = vunpack.c.l.b16 %v180
      %v649 = vunpack.c.l.b16 %v181
      %v650 = vunpack.c.h.b16 %v181
      %v651 = vunpack.c.l.b16 %v182
      %v652 = vunpack.c.h.b16 %v182
      %v653 = vunpack.c.l.b16 %v183
      %v654 = vunpack.c.h.b16 %v183
      %v655 = vunpack.c.l.b16 %v184
      %v656 = vunpack.c.h.b16 %v184
      %v657 = vunpack.c.l.b16 %v185
      %v658 = vunpack.c.l.b16 %v186
      %v659 = vunpack.c.h.b16 %v186
      %v660 = vunpack.c.l.b16 %v187
      %v661 = vunpack.c.h.b16 %v187
      %v662 = vunpack.c.l.b16 %v188
      %v663 = vunpack.c.h.b16 %v188
      %v664 = vunpack.c.l.b16 %v189
      %v665 = vunpack.c.h.b16 %v189
      %v666 = vunpack.c.l.b16 %v190
      %v667 = vunpack.c.l.b16 %v191
      %v668 = vunpack.c.h.b16 %v191
      %v669 = vunpack.c.l.b16 %v192
      %v670 = vunpack.c.h.b16 %v192
      %v671 = vunpack.c.l.b16 %v193
      %v672 = vunpack.c.h.b16 %v193
      %v673 = vunpack.c.l.b16 %v194
      %v674 = vunpack.c.h.b16 %v194
      %v675 = vunpack.c.l.b16 %v195
      %v676 = vunpack.c.l.b16 %v196
      %v677 = vunpack.c.h.b16 %v196
      %v678 = vunpack.c.l.b16 %v197
      %v679 = vunpack.c.h.b16 %v197
      %v680 = vunpack.c.l.b16 %v198
      %v681 = vunpack.c.h.b16 %v198
      %v682 = vunpack.c.l.b16 %v199
      %v683 = vunpack.c.h.b16 %v199
      %v684 = vunpack.c.l.b16 %v200
      %v685 = vunpack.c.l.b16 %v201
      %v686 = vunpack.c.h.b16 %v201
      %v687 = vunpack.c.l.b16 %v202
      %v688 = vunpack.c.h.b16 %v202
      %v689 = vunpack.c.l.b16 %v203
      %v690 = vunpack.c.h.b16 %v203
      %v691 = vunpack.c.l.b16 %v204
      %v692 = vunpack.c.h.b16 %v204
      %v693 = vunpack.c.l.b16 %v205
      %v694 = vunpack.c.l.b16 %v206
      %v695 = vunpack.c.h.b16 %v206
      %v696 = vunpack.c.l.b16 %v207
      %v697 = vunpack.c.h.b16 %v207
      %v698 = vunpack.c.l.b16 %v208
      %v699 = vunpack.c.h.b16 %v208
      %v700 = vunpack.c.l.b16 %v209
      %v701 = vunpack.c.h.b16 %v209
      %v702 = vunpack.c.l.b16 %v210
      %v703 = vunpack.c.l.b16 %v211
      %v704 = vunpack.c.h.b16 %v211
      %v705 = vunpack.c.l.b16 %v212
      %v706 = vunpack.c.h.b16 %v212
      %v707 = vunpack.c.l.b16 %v213
      %v708 = vunpack.c.h.b16 %v213
      %v709 = vunpack.c.l.b16 %v214
      %v710 = vunpack.c.h.b16 %v214
      %v711 = vunpack.c.l.b16 %v215
      %v712 = vunpack.c.l.b16 %v216
      %v713 = vunpack.c.h.b16 %v216
      %v714 = vunpack.c.l.b16 %v217
      %v715 = vunpack.c.h.b16 %v217
      %v716 = vunpack.c.l.b16 %v218
      %v717 = vunpack.c.h.b16 %v218
      %v718 = vunpack.c.l.b16 %v219
      %v719 = vunpack.c.h.b16 %v219
      %v720 = vunpack.c.l.b16 %v220
      %v721 = vunpack.c.l.b16 %v221
      %v722 = vunpack.c.h.b16 %v221
      %v723 = vunpack.c.l.b16 %v222
      %v724 = vunpack.c.h.b16 %v222
      %v725 = vunpack.c.l.b16 %v223
      %v726 = vunpack.c.h.b16 %v223
      %v727 = vunpack.c.l.b16 %v224
      %v728 = vunpack.c.h.b16 %v224
      %v729 = vunpack.c.l.b16 %v225
      %v730 = vunpack.c.l.b16 %v226
      %v731 = vunpack.c.h.b16 %v226
      %v732 = vunpack.c.l.b16 %v227
      %v733 = vunpack.c.h.b16 %v227
      %v734 = vunpack.c.l.b16 %v228
      %v735 = vunpack.c.h.b16 %v228
      %v736 = vunpack.c.l.b16 %v229
      %v737 = vunpack.c.h.b16 %v229
      %v738 = vunpack.c.l.b16 %v230
      %v739 = vunpack.c.l.b16 %v231
      %v740 = vunpack.c.h.b16 %v231
      %v741 = vunpack.c.l.b16 %v232
      %v742 = vunpack.c.h.b16 %v232
      %v743 = vunpack.c.l.b16 %v233
      %v744 = vunpack.c.h.b16 %v233
      %v745 = vunpack.c.l.b16 %v234
      %v746 = vunpack.c.h.b16 %v234
      %v747 = vunpack.c.l.b16 %v235
      %v748 = vunpack.c.l.b16 %v236
      %v749 = vunpack.c.h.b16 %v236
      %v750 = vunpack.c.l.b16 %v237
      %v751 = vunpack.c.h.b16 %v237
      %v752 = vunpack.c.l.b16 %v238
      %v753 = vunpack.c.h.b16 %v238
      %v754 = vunpack.c.l.b16 %v239
      %v755 = vunpack.c.h.b16 %v239
      %v756 = vunpack.c.l.b16 %v240
      %v757 = vunpack.c.l.b16 %v241
      %v758 = vunpack.c.h.b16 %v241
      %v759 = vunpack.c.l.b16 %v242
      %v760 = vunpack.c.h.b16 %v242
      %v761 = vunpack.c.l.b16 %v243
      %v762 = vunpack.c.h.b16 %v243
      %v763 = vunpack.c.l.b16 %v244
      %v764 = vunpack.c.h.b16 %v244
      %v765 = vunpack.c.l.b16 %v245
      %v766 = vunpack.c.l.b16 %v246
      %v767 = vunpack.c.h.b16 %v246
      %v768 = vunpack.c.l.b16 %v247
      %v769 = vunpack.c.h.b16 %v247
      %v770 = vunpack.c.l.b16 %v248
      %v771 = vunpack.c.h.b16 %v248
      %v772 = vunpack.c.l.b16 %v249
      %v773 = vunpack.c.h.b16 %v249
      %v774 = vunpack.c.l.b16 %v250
      %v775 = vunpack.c.l.b16 %v251
      %v776 = vunpack.c.h.b16 %v251
      %v777 = vunpack.c.l.b16 %v252
      %v778 = vunpack.c.h.b16 %v252
      %v779 = vunpack.c.l.b16 %v253
      %v780 = vunpack.c.h.b16 %v253
      %v781 = vunpack.c.l.b16 %v254
      %v782 = vunpack.c.h.b16 %v254
      %v783 = vunpack.c.l.b16 %v255
      %v784 = vunpack.c.l.b16 %v256
      %v785 = vunpack.c.h.b16 %v256
      %v786 = vunpack.c.l.b16 %v257
      %v787 = vunpack.c.h.b16 %v257
      %v788 = vunpack.c.l.b16 %v258
      %v789 = vunpack.c.h.b16 %v258
      %v790 = vunpack.c.l.b16 %v259
      %v791 = vunpack.c.h.b16 %v259
      %v792 = vunpack.c.l.b16 %v260
      %v793 = vunpack.c.l.b16 %v261
      %v794 = vunpack.c.h.b16 %v261
      %v795 = vunpack.c.l.b16 %v262
      %v796 = vunpack.c.h.b16 %v262
      %v797 = vunpack.c.l.b16 %v263
      %v798 = vunpack.c.h.b16 %v263
      %v799 = vunpack.c.l.b16 %v264
      %v800 = vunpack.c.h.b16 %v264
      %v801 = vunpack.c.l.b16 %v265
      %v802 = vunpack.c.l.b16 %v266
      %v803 = vunpack.c.h.b16 %v266
      %v804 = vunpack.c.l.b16 %v267
      %v805 = vunpack.c.h.b16 %v267
      %v806 = vunpack.c.l.b16 %v268
      %v807 = vunpack.c.h.b16 %v268
      %v808 = vunpack.c.l.b16 %v269
      %v809 = vunpack.c.h.b16 %v269
      %v810 = vunpack.c.l.b16 %v270
      %v811 = vunpack.c.l.b16 %v271
      %v812 = vunpack.c.h.b16 %v271
      %v813 = vunpack.c.l.b16 %v272
      %v814 = vunpack.c.h.b16 %v272
      %v815 = vunpack.c.l.b16 %v273
      %v816 = vunpack.c.h.b16 %v273
      %v817 = vunpack.c.l.b16 %v274
      %v818 = vunpack.c.h.b16 %v274
      %v819 = vunpack.c.l.b16 %v275
      %v820 = vunpack.c.l.b16 %v276
      %v821 = vunpack.c.h.b16 %v276
      %v822 = vunpack.c.l.b16 %v277
      %v823 = vunpack.c.h.b16 %v277
      %v824 = vunpack.c.l.b16 %v278
      %v825 = vunpack.c.h.b16 %v278
      %v826 = vunpack.c.l.b16 %v279
      %v827 = vunpack.c.h.b16 %v279
      %v828 = vunpack.c.l.b16 %v280
      %v829 = vunpack.c.l.b16 %v281
      %v830 = vunpack.c.h.b16 %v281
      %v831 = vunpack.c.l.b16 %v282
      %v832 = vunpack.c.h.b16 %v282
      %v833 = vunpack.c.l.b16 %v283
      %v834 = vunpack.c.h.b16 %v283
      %v835 = vunpack.c.l.b16 %v284
      %v836 = vunpack.c.h.b16 %v284
      %v837 = vunpack.c.l.b16 %v285
      %v838 = vunpack.c.l.b16 %v286
      %v839 = vunpack.c.h.b16 %v286
      %v840 = vunpack.c.l.b16 %v287
      %v841 = vunpack.c.h.b16 %v287
      %v842 = vunpack.c.l.b16 %v288
      %v843 = vunpack.c.h.b16 %v288
      %v844 = vunpack.c.l.b16 %v289
      %v845 = vunpack.c.h.b16 %v289
      %v846 = vunpack.c.l.b16 %v290
      %v847 = vunpack.c.l.b16 %v291
      %v848 = vunpack.c.h.b16 %v291
      %v849 = vunpack.c.l.b16 %v292
      %v850 = vunpack.c.h.b16 %v292
      %v851 = vunpack.c.l.b16 %v293
      %v852 = vunpack.c.h.b16 %v293
      %v853 = vunpack.c.l.b16 %v294
      %v854 = vunpack.c.h.b16 %v294
      %v855 = vunpack.c.l.b16 %v295
      %v856 = vunpack.c.l.b16 %v296
      %v857 = vunpack.c.h.b16 %v296
      %v858 = vunpack.c.l.b16 %v297
      %v859 = vunpack.c.h.b16 %v297
      %v860 = vunpack.c.l.b16 %v298
      %v861 = vunpack.c.h.b16 %v298
      %v862 = vunpack.c.l.b16 %v299
      %v863 = vunpack.c.h.b16 %v299
      %v864 = vunpack.c.l.b16 %v300
      %v865 = vunpack.c.l.b16 %v301
      %v866 = vunpack.c.h.b16 %v301
      %v867 = vunpack.c.l.b16 %v302
      %v868 = vunpack.c.h.b16 %v302
      %v869 = vunpack.c.l.b16 %v303
      %v870 = vunpack.c.h.b16 %v303
      %v871 = vunpack.c.l.b16 %v304
      %v872 = vunpack.c.h.b16 %v304
      %v873 = vunpack.c.l.b16 %v305
      %v874 = vunpack.c.l.b16 %v306
      %v875 = vunpack.c.h.b16 %v306
      %v876 = vunpack.c.l.b16 %v307
      %v877 = vunpack.c.h.b16 %v307
      %v878 = vunpack.c.l.b16 %v308
      %v879 = vunpack.c.h.b16 %v308
      %v880 = vunpack.c.l.b16 %v309
      %v881 = vunpack.c.h.b16 %v309
      %v882 = vunpack.c.l.b16 %v310
      %v883 = vunpack.c.l.b16 %v311
      %v884 = vunpack.c.h.b16 %v311
      %v885 = vunpack.c.l.b16 %v312
      %v886 = vunpack.c.h.b16 %v312
      %v887 = vunpack.c.l.b16 %v313
      %v888 = vunpack.c.h.b16 %v313
      %v889 = vunpack.c.l.b16 %v314
      %v890 = vunpack.c.h.b16 %v314
      %v891 = vunpack.c.l.b16 %v315
      %v892 = vunpack.c.l.b16 %v316
      %v893 = vunpack.c.h.b16 %v316
      %v894 = vunpack.c.l.b16 %v317
      %v895 = vunpack.c.h.b16 %v317
      %v896 = vunpack.c.l.b16 %v318
      %v897 = vunpack.c.h.b16 %v318
      %v898 = vunpack.c.l.b16 %v319
      %v899 = vunpack.c.h.b16 %v319
      %v900 = vunpack.c.l.b16 %v320
      %v901 = vunpack.c.l.b16 %v321
      %v902 = vunpack.c.h.b16 %v321
      %v903 = vunpack.c.l.b16 %v322
      %v904 = vunpack.c.h.b16 %v322
      %v905 = vunpack.c.l.b16 %v323
      %v906 = vunpack.c.h.b16 %v323
      %v907 = vunpack.c.l.b16 %v324
      %v908 = vunpack.c.h.b16 %v324
      %v909 = vunpack.c.l.b16 %v325
      %v910 = vunpack.c.l.b16 %v326
      %v911 = vunpack.c.h.b16 %v326
      %v912 = vunpack.c.l.b16 %v327
      %v913 = vunpack.c.h.b16 %v327
      %v914 = vunpack.c.l.b16 %v328
      %v915 = vunpack.c.h.b16 %v328
      %v916 = vunpack.c.l.b16 %v329
      %v917 = vunpack.c.h.b16 %v329
      %v918 = vunpack.c.l.b16 %v330
      %v919 = vunpack.c.l.b16 %v331
      %v920 = vunpack.c.h.b16 %v331
      %v921 = vunpack.c.l.b16 %v332
      %v922 = vunpack.c.h.b16 %v332
      %v923 = vunpack.c.l.b16 %v333
      %v924 = vunpack.c.h.b16 %v333
      %v925 = vunpack.c.l.b16 %v334
      %v926 = vunpack.c.h.b16 %v334
      %v927 = vunpack.c.l.b16 %v335
      %v928 = vpack.c.b16 %v649, %v640
      %v929 = vpack.c.b16 %v650, %v641
      %v930 = vpack.c.b16 %v651, %v642
      %v931 = vpack.c.b16 %v652, %v643
      %v932 = vpack.c.b16 %v653, %v644
      %v933 = vpack.c.b16 %v654, %v645
      %v934 = vpack.c.b16 %v655, %v646
      %v935 = vpack.c.b16 %v656, %v647
      %v936 = vpack.c.b16 %v657, %v648
      %v937 = vpack.c.b16 %v667, %v658
      %v938 = vpack.c.b16 %v668, %v659
      %v939 = vpack.c.b16 %v669, %v660
      %v940 = vpack.c.b16 %v670, %v661
      %v941 = vpack.c.b16 %v671, %v662
      %v942 = vpack.c.b16 %v672, %v663
      %v943 = vpack.c.b16 %v673, %v664
      %v944 = vpack.c.b16 %v674, %v665
      %v945 = vpack.c.b16 %v675, %v666
      %v946 = vpack.c.b16 %v685, %v676
      %v947 = vpack.c.b16 %v686, %v677
      %v948 = vpack.c.b16 %v687, %v678
      %v949 = vpack.c.b16 %v688, %v679
      %v950 = vpack.c.b16 %v689, %v680
      %v951 = vpack.c.b16 %v690, %v681
      %v952 = vpack.c.b16 %v691, %v682
      %v953 = vpack.c.b16 %v692, %v683
      %v954 = vpack.c.b16 %v693, %v684
      %v955 = vpack.c.b16 %v703, %v694
      %v956 = vpack.c.b16 %v704, %v695
      %v957 = vpack.c.b16 %v705, %v696
      %v958 = vpack.c.b16 %v706, %v697
      %v959 = vpack.c.b16 %v707, %v698
      %v960 = vpack.c.b16 %v708, %v699
      %v961 = vpack.c.b16 %v709, %v700
      %v962 = vpack.c.b16 %v710, %v701
      %v963 = vpack.c.b16 %v711, %v702
      %v964 = vpack.c.b16 %v721, %v712
      %v965 = vpack.c.b16 %v722, %v713
      %v966 = vpack.c.b16 %v723, %v714
      %v967 = vpack.c.b16 %v724, %v715
      %v968 = vpack.c.b16 %v725, %v716
      %v969 = vpack.c.b16 %v726, %v717
      %v970 = vpack.c.b16 %v727, %v718
      %v971 = vpack.c.b16 %v728, %v719
      %v972 = vpack.c.b16 %v729, %v720
      %v973 = vpack.c.b16 %v739, %v730
      %v974 = vpack.c.b16 %v740, %v731
      %v975 = vpack.c.b16 %v741, %v732
      %v976 = vpack.c.b16 %v742, %v733
      %v977 = vpack.c.b16 %v743, %v734
      %v978 = vpack.c.b16 %v744, %v735
      %v979 = vpack.c.b16 %v745, %v736
      %v980 = vpack.c.b16 %v746, %v737
      %v981 = vpack.c.b16 %v747, %v738
      %v982 = vpack.c.b16 %v757, %v748
      %v983 = vpack.c.b16 %v758, %v749
      %v984 = vpack.c.b16 %v759, %v750
      %v985 = vpack.c.b16 %v760, %v751
      %v986 = vpack.c.b16 %v761, %v752
      %v987 = vpack.c.b16 %v762, %v753
      %v988 = vpack.c.b16 %v763, %v754
      %v989 = vpack.c.b16 %v764, %v755
      %v990 = vpack.c.b16 %v765, %v756
      %v991 = vpack.c.b16 %v775, %v766
      %v992 = vpack.c.b16 %v776, %v767
      %v993 = vpack.c.b16 %v777, %v768
      %v994 = vpack.c.b16 %v778, %v769
      %v995 = vpack.c.b16 %v779, %v770
      %v996 = vpack.c.b16 %v780, %v771
      %v997 = vpack.c.b16 %v781, %v772
      %v998 = vpack.c.b16 %v782, %v773
      %v999 = vpack.c.b16 %v783, %v774
      %v1000 = vpack.c.b16 %v793, %v784
      %v1001 = vpack.c.b16 %v794, %v785
      %v1002 = vpack.c.b16 %v795, %v786
      %v1003 = vpack.c.b16 %v796, %v787
      %v1004 = vpack.c.b16 %v797, %v788
      %v1005 = vpack.c.b16 %v798, %v789
      %v1006 = vpack.c.b16 %v799, %v790
      %v1007 = vpack.c.b16 %v800, %v791
      %v1008 = vpack.c.b16 %v801, %v792
      %v1009 = vpack.c.b16 %v811, %v802
      %v1010 = vpack.c.b16 %v812, %v803
      %v1011 = vpack.c.b16 %v813, %v804
      %v1012 = vpack.c.b16 %v814, %v805
      %v1013 = vpack.c.b16 %v815, %v806
      %v1014 = vpack.c.b16 %v816, %v807
      %v1015 = vpack.c.b16 %v817, %v808
      %v1016 = vpack.c.b16 %v818, %v809
      %v1017 = vpack.c.b16 %v819, %v810
      %v1018 = vpack.c.b16 %v829, %v820
      %v1019 = vpack.c.b16 %v830, %v821
      %v1020 = vpack.c.b16 %v831, %v822
      %v1021 = vpack.c.b16 %v832, %v823
      %v1022 = vpack.c.b16 %v833, %v824
      %v1023 = vpack.c.b16 %v834, %v825
      %v1024 = vpack.c.b16 %v835, %v826
      %v1025 = vpack.c.b16 %v836, %v827
      %v1026 = vpack.c.b16 %v837, %v828
      %v1027 = vpack.c.b16 %v847, %v838
      %v1028 = vpack.c.b16 %v848, %v839
      %v1029 = vpack.c.b16 %v849, %v840
      %v1030 = vpack.c.b16 %v850, %v841
      %v1031 = vpack.c.b16 %v851, %v842
      %v1032 = vpack.c.b16 %v852, %v843
      %v1033 = vpack.c.b16 %v853, %v844
      %v1034 = vpack.c.b16 %v854, %v845
      %v1035 = vpack.c.b16 %v855, %v846
      %v1036 = vpack.c.b16 %v865, %v856
      %v1037 = vpack.c.b16 %v866, %v857
      %v1038 = vpack.c.b16 %v867, %v858
      %v1039 = vpack.c.b16 %v868, %v859
      %v1040 = vpack.c.b16 %v869, %v860
      %v1041 = vpack.c.b16 %v870, %v861
      %v1042 = vpack.c.b16 %v871, %v862
      %v1043 = vpack.c.b16 %v872, %v863
      %v1044 = vpack.c.b16 %v873, %v864
      %v1045 = vpack.c.b16 %v883, %v874
      %v1046 = vpack.c.b16 %v884, %v875
      %v1047 = vpack.c.b16 %v885, %v876
      %v1048 = vpack.c.b16 %v886, %v877
      %v1049 = vpack.c.b16 %v887, %v878
      %v1050 = vpack.c.b16 %v888, %v879
      %v1051 = vpack.c.b16 %v889, %v880
      %v1052 = vpack.c.b16 %v890, %v881
      %v1053 = vpack.c.b16 %v891, %v882
      %v1054 = vpack.c.b16 %v901, %v892
      %v1055 = vpack.c.b16 %v902, %v893
      %v1056 = vpack.c.b16 %v903, %v894
      %v1057 = vpack.c.b16 %v904, %v895
      %v1058 = vpack.c.b16 %v905, %v896
      %v1059 = vpack.c.b16 %v906, %v897
      %v1060 = vpack.c.b16 %v907, %v898
      %v1061 = vpack.c.b16 %v908, %v899
      %v1062 = vpack.c.b16 %v909, %v900
      %v1063 = vpack.c.b16 %v919, %v910
      %v1064 = vpack.c.b16 %v920, %v911
      %v1065 = vpack.c.b16 %v921, %v912
      %v1066 = vpack.c.b16 %v922, %v913
      %v1067 = vpack.c.b16 %v923, %v914
      %v1068 = vpack.c.b16 %v924, %v915
      %v1069 = vpack.c.b16 %v925, %v916
      %v1070 = vpack.c.b16 %v926, %v917
      %v1071 = vpack.c.b16 %v927, %v918
      %v1360 = vunpack.c.l.b16 %v336
      %v1361 = vunpack.c.l.b16 %v337
      %v1362 = vunpack.c.l.b16 %v338
      %v1363 = vunpack.c.l.b16 %v339
      %v1364 = vunpack.c.l.b16 %v340
      %v1365 = vunpack.c.l.b16 %v341
      %v1366 = vunpack.c.l.b16 %v342
      %v1367 = vunpack.c.l.b16 %v343
      %v1368 = vunpack.c.l.b16 %v344
      %v1369 = vunpack.c.l.b16 %v345
      %v1370 = vunpack.c.l.b16 %v346
      %v1371 = vunpack.c.l.b16 %v347
      %v1372 = vunpack.c.l.b16 %v348
      %v1373 = vunpack.c.l.b16 %v349
      %v1374 = vunpack.c.l.b16 %v350
      %v1375 = vunpack.c.l.b16 %v351
      %v1376 = vunpack.c.l.b16 %v352
      %v1377 = vunpack.c.l.b16 %v353
      %v1378 = vunpack.c.l.b16 %v354
      %v1379 = vunpack.c.l.b16 %v355
      %v1380 = vunpack.c.l.b16 %v356
      %v1381 = vunpack.c.l.b16 %v357
      %v1382 = vunpack.c.l.b16 %v358
      %v1383 = vunpack.c.l.b16 %v359
      %v1384 = vunpack.c.l.b16 %v360
      %v1385 = vunpack.c.l.b16 %v361
      %v1386 = vunpack.c.l.b16 %v362
      %v1387 = vunpack.c.l.b16 %v363
      %v1388 = vunpack.c.l.b16 %v364
      %v1389 = vunpack.c.l.b16 %v365
      %v1390 = vunpack.c.l.b16 %v366
      %v1391 = vunpack.c.l.b16 %v367
      %v1392 = vunpack.c.l.b16 %v368
      %v1393 = vunpack.c.l.b16 %v369
      %v1394 = vunpack.c.l.b16 %v370
      %v1395 = vunpack.c.l.b16 %v371
      %v1396 = vunpack.c.l.b16 %v372
      %v1397 = vunpack.c.l.b16 %v373
      %v1398 = vunpack.c.l.b16 %v374
      %v1399 = vunpack.c.l.b16 %v375
      %v1400 = vunpack.c.l.b16 %v376
      %v1401 = vunpack.c.l.b16 %v377
      %v1402 = vunpack.c.l.b16 %v378
      %v1403 = vunpack.c.l.b16 %v379
      %v1404 = vunpack.c.l.b16 %v380
      %v1405 = vunpack.c.l.b16 %v381
      %v1406 = vunpack.c.l.b16 %v382
      %v1407 = vunpack.c.l.b16 %v383
      %v1408 = vunpack.c.l.b16 %v384
      %v1409 = vunpack.c.l.b16 %v385
      %v1410 = vunpack.c.l.b16 %v386
      %v1411 = vunpack.c.l.b16 %v387
      %v1412 = vunpack.c.l.b16 %v388
      %v1413 = vunpack.c.l.b16 %v389
      %v1414 = vunpack.c.l.b16 %v390
      %v1415 = vunpack.c.l.b16 %v391
      %v1416 = vunpack.c.l.b16 %v392
      %v1417 = vunpack.c.l.b16 %v393
      %v1418 = vunpack.c.l.b16 %v394
      %v1419 = vunpack.c.l.b16 %v395
      %v1420 = vunpack.c.l.b16 %v396
      %v1421 = vunpack.c.l.b16 %v397
      %v1422 = vunpack.c.l.b16 %v398
      %v1423 = vunpack.c.l.b16 %v399
      %v1424 = vunpack.c.l.b16 %v400
      %v1425 = vunpack.c.l.b16 %v401
      %v1426 = vunpack.c.l.b16 %v402
      %v1427 = vunpack.c.l.b16 %v403
      %v1428 = vunpack.c.l.b16 %v404
      %v1429 = vunpack.c.l.b16 %v405
      %v1430 = vunpack.c.l.b16 %v406
      %v1431 = vunpack.c.l.b16 %v407
      %v1432 = vunpack.c.l.b16 %v408
      %v1433 = vunpack.c.l.b16 %v409
      %v1434 = vunpack.c.l.b16 %v410
      %v1435 = vunpack.c.l.b16 %v411
      %v1436 = vunpack.c.l.b16 %v412
      %v1437 = vunpack.c.l.b16 %v413
      %v1438 = vunpack.c.l.b16 %v414
      %v1439 = vunpack.c.l.b16 %v415
      %v1440 = vunpack.c.l.b16 %v416
      %v1441 = vunpack.c.l.b16 %v417
      %v1442 = vunpack.c.l.b16 %v418
      %v1443 = vunpack.c.l.b16 %v419
      %v1444 = vunpack.c.l.b16 %v420
      %v1445 = vunpack.c.l.b16 %v421
      %v1446 = vunpack.c.l.b16 %v422
      %v1447 = vunpack.c.l.b16 %v423
      %v1448 = vunpack.c.l.b16 %v424
      %v1449 = vunpack.c.l.b16 %v425
      %v1450 = vunpack.c.l.b16 %v426
      %v1451 = vunpack.c.l.b16 %v427
      %v1452 = vunpack.c.l.b16 %v428
      %v1453 = vunpack.c.l.b16 %v429
      %v1454 = vunpack.c.l.b16 %v430
      %v1455 = vunpack.c.l.b16 %v431
      %v1456 = vunpack.c.l.b16 %v432
      %v1457 = vunpack.c.l.b16 %v433
      %v1458 = vunpack.c.l.b16 %v434
      %v1459 = vunpack.c.l.b16 %v435
      %v1460 = vunpack.c.l.b16 %v436
      %v1461 = vunpack.c.l.b16 %v437
      %v1462 = vunpack.c.l.b16 %v438
      %v1463 = vunpack.c.l.b16 %v439
      %v1464 = vunpack.c.l.b16 %v440
      %v1465 = vunpack.c.l.b16 %v441
      %v1466 = vunpack.c.l.b16 %v442
      %v1467 = vunpack.c.l.b16 %v443
      %v1468 = vunpack.c.l.b16 %v444
      %v1469 = vunpack.c.l.b16 %v445
      %v1470 = vunpack.c.l.b16 %v446
      %v1471 = vunpack.c.l.b16 %v447
      %v1472 = vunpack.c.l.b16 %v448
      %v1473 = vunpack.c.l.b16 %v449
      %v1474 = vunpack.c.l.b16 %v450
      %v1475 = vunpack.c.l.b16 %v451
      %v1476 = vunpack.c.l.b16 %v452
      %v1477 = vunpack.c.l.b16 %v453
      %v1478 = vunpack.c.l.b16 %v454
      %v1479 = vunpack.c.l.b16 %v455
      %v1480 = vunpack.c.l.b16 %v456
      %v1481 = vunpack.c.l.b16 %v457
      %v1482 = vunpack.c.l.b16 %v458
      %v1483 = vunpack.c.l.b16 %v459
      %v1484 = vunpack.c.l.b16 %v460
      %v1485 = vunpack.c.l.b16 %v461
      %v1486 = vunpack.c.l.b16 %v462
      %v1487 = vunpack.c.l.b16 %v463
      %v1488 = vunpack.c.l.b16 %v464
      %v1489 = vunpack.c.l.b16 %v465
      %v1490 = vunpack.c.l.b16 %v466
      %v1491 = vunpack.c.l.b16 %v467
      %v1492 = vunpack.c.l.b16 %v468
      %v1493 = vunpack.c.l.b16 %v469
      %v1494 = vunpack.c.l.b16 %v470
      %v1495 = vunpack.c.l.b16 %v471
      %v1496 = vunpack.c.l.b16 %v472
      %v1497 = vunpack.c.l.b16 %v473
      %v1498 = vunpack.c.l.b16 %v474
      %v1499 = vunpack.c.l.b16 %v475
      %v1500 = vunpack.c.l.b16 %v476
      %v1501 = vunpack.c.l.b16 %v477
      %v1502 = vunpack.c.l.b16 %v478
      %v1503 = vunpack.c.l.b16 %v479
      %v1504 = vpack.c.b16 %v1361, %v1360
      %v1505 = vpack.c.b16 %v1363, %v1362
      %v1506 = vpack.c.b16 %v1365, %v1364
      %v1507 = vpack.c.b16 %v1367, %v1366
      %v1508 = vpack.c.b16 %v1369, %v1368
      %v1509 = vpack.c.b16 %v1371, %v1370
      %v1510 = vpack.c.b16 %v1373, %v1372
      %v1511 = vpack.c.b16 %v1375, %v1374
      %v1512 = vpack.c.b16 %v1377, %v1376
      %v1513 = vpack.c.b16 %v1379, %v1378
      %v1514 = vpack.c.b16 %v1381, %v1380
      %v1515 = vpack.c.b16 %v1383, %v1382
      %v1516 = vpack.c.b16 %v1385, %v1384
      %v1517 = vpack.c.b16 %v1387, %v1386
      %v1518 = vpack.c.b16 %v1389, %v1388
      %v1519 = vpack.c.b16 %v1391, %v1390
      %v1520 = vpack.c.b16 %v1393, %v1392
      %v1521 = vpack.c.b16 %v1395, %v1394
      %v1522 = vpack.c.b16 %v1397, %v1396
      %v1523 = vpack.c.b16 %v1399, %v1398
      %v1524 = vpack.c.b16 %v1401, %v1400
      %v1525 = vpack.c.b16 %v1403, %v1402
      %v1526 = vpack.c.b16 %v1405, %v1404
      %v1527 = vpack.c.b16 %v1407, %v1406
      %v1528 = vpack.c.b16 %v1409, %v1408
      %v1529 = vpack.c.b16 %v1411, %v1410
      %v1530 = vpack.c.b16 %v1413, %v1412
      %v1531 = vpack.c.b16 %v1415, %v1414
      %v1532 = vpack.c.b16 %v1417, %v1416
      %v1533 = vpack.c.b16 %v1419, %v1418
      %v1534 = vpack.c.b16 %v1421, %v1420
      %v1535 = vpack.c.b16 %v1423, %v1422
      %v1536 = vpack.c.b16 %v1425, %v1424
      %v1537 = vpack.c.b16 %v1427, %v1426
      %v1538 = vpack.c.b16 %v1429, %v1428
      %v1539 = vpack.c.b16 %v1431, %v1430
      %v1540 = vpack.c.b16 %v1433, %v1432
      %v1541 = vpack.c.b16 %v1435, %v1434
      %v1542 = vpack.c.b16 %v1437, %v1436
      %v1543 = vpack.c.b16 %v1439, %v1438
      %v1544 = vpack.c.b16 %v1441, %v1440
      %v1545 = vpack.c.b16 %v1443, %v1442
      %v1546 = vpack.c.b16 %v1445, %v1444
      %v1547 = vpack.c.b16 %v1447, %v1446
      %v1548 = vpack.c.b16 %v1449, %v1448
      %v1549 = vpack.c.b16 %v1451, %v1450
      %v1550 = vpack.c.b16 %v1453, %v1452
      %v1551 = vpack.c.b16 %v1455, %v1454
      %v1552 = vpack.c.b16 %v1457, %v1456
      %v1553 = vpack.c.b16 %v1459, %v1458
      %v1554 = vpack.c.b16 %v1461, %v1460
      %v1555 = vpack.c.b16 %v1463, %v1462
      %v1556 = vpack.c.b16 %v1465, %v1464
      %v1557 = vpack.c.b16 %v1467, %v1466
      %v1558 = vpack.c.b16 %v1469, %v1468
      %v1559 = vpack.c.b16 %v1471, %v1470
      %v1560 = vpack.c.b16 %v1473, %v1472
      %v1561 = vpack.c.b16 %v1475, %v1474
      %v1562 = vpack.c.b16 %v1477, %v1476
      %v1563 = vpack.c.b16 %v1479, %v1478
      %v1564 = vpack.c.b16 %v1481, %v1480
      %v1565 = vpack.c.b16 %v1483, %v1482
      %v1566 = vpack.c.b16 %v1485, %v1484
      %v1567 = vpack.c.b16 %v1487, %v1486
      %v1568 = vpack.c.b16 %v1489, %v1488
      %v1569 = vpack.c.b16 %v1491, %v1490
      %v1570 = vpack.c.b16 %v1493, %v1492
      %v1571 = vpack.c.b16 %v1495, %v1494
      %v1572 = vpack.c.b16 %v1497, %v1496
      %v1573 = vpack.c.b16 %v1499, %v1498
      %v1574 = vpack.c.b16 %v1501, %v1500
      %v1575 = vpack.c.b16 %v1503, %v1502
      %1648 = vmatprep.subr.bf16.mxu0 0
      %1649 = vmatpush1.bf16.msra.mxu0 %v1504
      %1650 = vmatprep.subr.bf16.mxu0 0
      %1651 = vmatpush1.bf16.msra.mxu0 %v1505
      %1652 = vmatprep.subr.bf16.mxu0 0
      %1653 = vmatpush1.bf16.msra.mxu0 %v1506
      %1654 = vmatprep.subr.bf16.mxu0 0
      %1655 = vmatpush1.bf16.msra.mxu0 %v1507
      %1656 = vmatprep.subr.bf16.mxu0 0
      %1657 = vmatpush1.bf16.msra.mxu0 %v1508
      %1658 = vmatprep.subr.bf16.mxu0 0
      %1659 = vmatpush1.bf16.msra.mxu0 %v1509
      %1660 = vmatprep.subr.bf16.mxu0 0
      %1661 = vmatpush1.bf16.msra.mxu0 %v1510
      %1662 = vmatprep.subr.bf16.mxu0 0
      %1663 = vmatpush1.bf16.msra.mxu0 %v1511
      %1664 = vmatprep.subr.bf16.mxu0 0
      %1665 = vmatpush1.bf16.msra.mxu0 %v1512
      %1666 = vmatprep.subr.bf16.mxu0 0
      %1667 = vmatpush1.bf16.msra.mxu0 %v1513
      %1668 = vmatprep.subr.bf16.mxu0 0
      %1669 = vmatpush1.bf16.msra.mxu0 %v1514
      %1670 = vmatprep.subr.bf16.mxu0 0
      %1671 = vmatpush1.bf16.msra.mxu0 %v1515
      %1672 = vmatprep.subr.bf16.mxu0 0
      %1673 = vmatpush1.bf16.msra.mxu0 %v1516
      %1674 = vmatprep.subr.bf16.mxu0 0
      %1675 = vmatpush1.bf16.msra.mxu0 %v1517
      %1676 = vmatprep.subr.bf16.mxu0 0
      %1677 = vmatpush1.bf16.msra.mxu0 %v1518
      %1678 = vmatprep.subr.bf16.mxu0 0
      %1679 = vmatpush1.bf16.msra.mxu0 %v1519
      %1680 = vmatprep.mubr.bf16.mxu0 %v929
      %1681 = vmatmul.mubr.bf16.gmra.mrb[0].mxu0 %v928
      %v1682 = vpop.f32.mrb[0].mxu0
      %v1683 = vadd.f32 0.0, %v1682
      %v1684 = vpop.f32.mrb[0].mxu0
      %v1685 = vpop.f32.mrb[0].mxu0
      %v1686 = vadd.f32 0.0, %v1685
      %v1687 = vpop.f32.mrb[0].mxu0
      %1688 = vmatprep.mubr.bf16.mxu0 %v938
      %1689 = vmatmul.mubr.bf16.gmra.mrb[0].mxu0 %v937
      %v1690 = vpop.f32.mrb[0].mxu0
      %v1691 = vadd.f32 0.0, %v1690
      %v1692 = vpop.f32.mrb[0].mxu0
      %v1693 = vpop.f32.mrb[0].mxu0
      %v1694 = vadd.f32 0.0, %v1693
      %v1695 = vpop.f32.mrb[0].mxu0
      %1696 = vmatprep.mubr.bf16.mxu0 %v947
      %1697 = vmatmul.mubr.bf16.gmra.mrb[0].mxu0 %v946
      %v1698 = vpop.f32.mrb[0].mxu0
      %v1699 = vadd.f32 0.0, %v1698
      %v1700 = vpop.f32.mrb[0].mxu0
      %v1701 = vpop.f32.mrb[0].mxu0
      %v1702 = vadd.f32 0.0, %v1701
      %v1703 = vpop.f32.mrb[0].mxu0
      %1704 = vmatprep.mubr.bf16.mxu0 %v956
      %1705 = vmatmul.mubr.bf16.gmra.mrb[0].mxu0 %v955
      %v1706 = vpop.f32.mrb[0].mxu0
      %v1707 = vadd.f32 0.0, %v1706
      %v1708 = vpop.f32.mrb[0].mxu0
      %v1709 = vpop.f32.mrb[0].mxu0
      %v1710 = vadd.f32 0.0, %v1709
      %v1711 = vpop.f32.mrb[0].mxu0
      %1712 = vmatprep.mubr.bf16.mxu0 %v965
      %1713 = vmatmul.mubr.bf16.gmra.mrb[0].mxu0 %v964
      %v1714 = vpop.f32.mrb[0].mxu0
      %v1715 = vadd.f32 0.0, %v1714
      %v1716 = vpop.f32.mrb[0].mxu0
      %v1717 = vpop.f32.mrb[0].mxu0
      %v1718 = vadd.f32 0.0, %v1717
      %v1719 = vpop.f32.mrb[0].mxu0
      %1720 = vmatprep.mubr.bf16.mxu0 %v974
      %1721 = vmatmul.mubr.bf16.gmra.mrb[0].mxu0 %v973
      %v1722 = vpop.f32.mrb[0].mxu0
      %v1723 = vadd.f32 0.0, %v1722
      %v1724 = vpop.f32.mrb[0].mxu0
      %v1725 = vpop.f32.mrb[0].mxu0
      %v1726 = vadd.f32 0.0, %v1725
      %v1727 = vpop.f32.mrb[0].mxu0
      %1728 = vmatprep.mubr.bf16.mxu0 %v983
      %1729 = vmatmul.mubr.bf16.gmra.mrb[0].mxu0 %v982
      %v1730 = vpop.f32.mrb[0].mxu0
      %v1731 = vadd.f32 0.0, %v1730
      %v1732 = vpop.f32.mrb[0].mxu0
      %v1733 = vpop.f32.mrb[0].mxu0
      %v1734 = vadd.f32 0.0, %v1733
      %v1735 = vpop.f32.mrb[0].mxu0
      %1736 = vmatprep.mubr.bf16.mxu0 %v992
      %1737 = vmatmul.mubr.bf16.gmra.mrb[0].mxu0 %v991
      %v1738 = vpop.f32.mrb[0].mxu0
      %v1739 = vadd.f32 0.0, %v1738
      %v1740 = vpop.f32.mrb[0].mxu0
      %v1741 = vpop.f32.mrb[0].mxu0
      %v1742 = vadd.f32 0.0, %v1741
      %v1743 = vpop.f32.mrb[0].mxu0
      %1744 = vmatprep.mubr.bf16.mxu0 %v1001
      %1745 = vmatmul.mubr.bf16.gmra.mrb[0].mxu0 %v1000
      %v1746 = vpop.f32.mrb[0].mxu0
      %v1747 = vadd.f32 0.0, %v1746
      %v1748 = vpop.f32.mrb[0].mxu0
      %v1749 = vpop.f32.mrb[0].mxu0
      %v1750 = vadd.f32 0.0, %v1749
      %v1751 = vpop.f32.mrb[0].mxu0
      %1752 = vmatprep.mubr.bf16.mxu0 %v1010
      %1753 = vmatmul.mubr.bf16.gmra.mrb[0].mxu0 %v1009
      %v1754 = vpop.f32.mrb[0].mxu0
      %v1755 = vadd.f32 0.0, %v1754
      %v1756 = vpop.f32.mrb[0].mxu0
      %v1757 = vpop.f32.mrb[0].mxu0
      %v1758 = vadd.f32 0.0, %v1757
      %v1759 = vpop.f32.mrb[0].mxu0
      %1760 = vmatprep.mubr.bf16.mxu0 %v1019
      %1761 = vmatmul.mubr.bf16.gmra.mrb[0].mxu0 %v1018
      %v1762 = vpop.f32.mrb[0].mxu0
      %v1763 = vadd.f32 0.0, %v1762
      %v1764 = vpop.f32.mrb[0].mxu0
      %v1765 = vpop.f32.mrb[0].mxu0
      %v1766 = vadd.f32 0.0, %v1765
      %v1767 = vpop.f32.mrb[0].mxu0
      %1768 = vmatprep.mubr.bf16.mxu0 %v1028
      %1769 = vmatmul.mubr.bf16.gmra.mrb[0].mxu0 %v1027
      %v1770 = vpop.f32.mrb[0].mxu0
      %v1771 = vadd.f32 0.0, %v1770
      %v1772 = vpop.f32.mrb[0].mxu0
      %v1773 = vpop.f32.mrb[0].mxu0
      %v1774 = vadd.f32 0.0, %v1773
      %v1775 = vpop.f32.mrb[0].mxu0
      %1776 = vmatprep.mubr.bf16.mxu0 %v1037
      %1777 = vmatmul.mubr.bf16.gmra.mrb[0].mxu0 %v1036
      %v1778 = vpop.f32.mrb[0].mxu0
      %v1779 = vadd.f32 0.0, %v1778
      %v1780 = vpop.f32.mrb[0].mxu0
      %v1781 = vpop.f32.mrb[0].mxu0
      %v1782 = vadd.f32 0.0, %v1781
      %v1783 = vpop.f32.mrb[0].mxu0
      %1784 = vmatprep.mubr.bf16.mxu0 %v1046
      %1785 = vmatmul.mubr.bf16.gmra.mrb[0].mxu0 %v1045
      %v1786 = vpop.f32.mrb[0].mxu0
      %v1787 = vadd.f32 0.0, %v1786
      %v1788 = vpop.f32.mrb[0].mxu0
      %v1789 = vpop.f32.mrb[0].mxu0
      %v1790 = vadd.f32 0.0, %v1789
      %v1791 = vpop.f32.mrb[0].mxu0
      %1792 = vmatprep.mubr.bf16.mxu0 %v1055
      %1793 = vmatmul.mubr.bf16.gmra.mrb[0].mxu0 %v1054
      %v1794 = vpop.f32.mrb[0].mxu0
      %v1795 = vadd.f32 0.0, %v1794
      %v1796 = vpop.f32.mrb[0].mxu0
      %v1797 = vpop.f32.mrb[0].mxu0
      %v1798 = vadd.f32 0.0, %v1797
      %v1799 = vpop.f32.mrb[0].mxu0
      %1800 = vmatprep.mubr.bf16.mxu0 %v1064
      %1801 = vmatmul.mubr.bf16.gmra.mrb[0].mxu0 %v1063
      %v1802 = vpop.f32.mrb[0].mxu0
      %v1803 = vadd.f32 0.0, %v1802
      %v1804 = vpop.f32.mrb[0].mxu0
      %v1805 = vpop.f32.mrb[0].mxu0
      %v1806 = vadd.f32 0.0, %v1805
      %v1807 = vpop.f32.mrb[0].mxu0
      %1808 = vdwg.mxu0
      %1809 = vmatprep.subr.bf16.mxu0 0
      %1810 = vmatpush1.bf16.msra.mxu0 %v1520
      %1811 = vmatprep.subr.bf16.mxu0 0
      %1812 = vmatpush1.bf16.msra.mxu0 %v1521
      %1813 = vmatprep.subr.bf16.mxu0 0
      %1814 = vmatpush1.bf16.msra.mxu0 %v1522
      %1815 = vmatprep.subr.bf16.mxu0 0
      %1816 = vmatpush1.bf16.msra.mxu0 %v1523
      %1817 = vmatprep.subr.bf16.mxu0 0
      %1818 = vmatpush1.bf16.msra.mxu0 %v1524
      %1819 = vmatprep.subr.bf16.mxu0 0
      %1820 = vmatpush1.bf16.msra.mxu0 %v1525
      %1821 = vmatprep.subr.bf16.mxu0 0
      %1822 = vmatpush1.bf16.msra.mxu0 %v1526
      %1823 = vmatprep.subr.bf16.mxu0 0
      %1824 = vmatpush1.bf16.msra.mxu0 %v1527
      %1825 = vmatprep.subr.bf16.mxu0 0
      %1826 = vmatpush1.bf16.msra.mxu0 %v1528
      %1827 = vmatprep.subr.bf16.mxu0 0
      %1828 = vmatpush1.bf16.msra.mxu0 %v1529
      %1829 = vmatprep.subr.bf16.mxu0 0
      %1830 = vmatpush1.bf16.msra.mxu0 %v1530
      %1831 = vmatprep.subr.bf16.mxu0 0
      %1832 = vmatpush1.bf16.msra.mxu0 %v1531
      %1833 = vmatprep.subr.bf16.mxu0 0
      %1834 = vmatpush1.bf16.msra.mxu0 %v1532
      %1835 = vmatprep.subr.bf16.mxu0 0
      %1836 = vmatpush1.bf16.msra.mxu0 %v1533
      %1837 = vmatprep.subr.bf16.mxu0 0
      %1838 = vmatpush1.bf16.msra.mxu0 %v1534
      %1839 = vmatprep.subr.bf16.mxu0 0
      %1840 = vmatpush1.bf16.msra.mxu0 %v1535
      %1841 = vmatprep.mubr.bf16.mxu0 %v931
      %1842 = vmatmul.mubr.bf16.gmra.mrb[0].mxu0 %v930
      %v1843 = vpop.f32.mrb[0].mxu0
      %v1844 = vadd.f32 %v1683, %v1843
      %v1845 = vpop.f32.mrb[0].mxu0
      %v1846 = vpop.f32.mrb[0].mxu0
      %v1847 = vadd.f32 %v1686, %v1846
      %v1848 = vpop.f32.mrb[0].mxu0
      %1849 = vmatprep.mubr.bf16.mxu0 %v940
      %1850 = vmatmul.mubr.bf16.gmra.mrb[0].mxu0 %v939
      %v1851 = vpop.f32.mrb[0].mxu0
      %v1852 = vadd.f32 %v1691, %v1851
      %v1853 = vpop.f32.mrb[0].mxu0
      %v1854 = vpop.f32.mrb[0].mxu0
      %v1855 = vadd.f32 %v1694, %v1854
      %v1856 = vpop.f32.mrb[0].mxu0
      %1857 = vmatprep.mubr.bf16.mxu0 %v949
      %1858 = vmatmul.mubr.bf16.gmra.mrb[0].mxu0 %v948
      %v1859 = vpop.f32.mrb[0].mxu0
      %v1860 = vadd.f32 %v1699, %v1859
      %v1861 = vpop.f32.mrb[0].mxu0
      %v1862 = vpop.f32.mrb[0].mxu0
      %v1863 = vadd.f32 %v1702, %v1862
      %v1864 = vpop.f32.mrb[0].mxu0
      %1865 = vmatprep.mubr.bf16.mxu0 %v958
      %1866 = vmatmul.mubr.bf16.gmra.mrb[0].mxu0 %v957
      %v1867 = vpop.f32.mrb[0].mxu0
      %v1868 = vadd.f32 %v1707, %v1867
      %v1869 = vpop.f32.mrb[0].mxu0
      %v1870 = vpop.f32.mrb[0].mxu0
      %v1871 = vadd.f32 %v1710, %v1870
      %v1872 = vpop.f32.mrb[0].mxu0
      %1873 = vmatprep.mubr.bf16.mxu0 %v967
      %1874 = vmatmul.mubr.bf16.gmra.mrb[0].mxu0 %v966
      %v1875 = vpop.f32.mrb[0].mxu0
      %v1876 = vadd.f32 %v1715, %v1875
      %v1877 = vpop.f32.mrb[0].mxu0
      %v1878 = vpop.f32.mrb[0].mxu0
      %v1879 = vadd.f32 %v1718, %v1878
      %v1880 = vpop.f32.mrb[0].mxu0
      %1881 = vmatprep.mubr.bf16.mxu0 %v976
      %1882 = vmatmul.mubr.bf16.gmra.mrb[0].mxu0 %v975
      %v1883 = vpop.f32.mrb[0].mxu0
      %v1884 = vadd.f32 %v1723, %v1883
      %v1885 = vpop.f32.mrb[0].mxu0
      %v1886 = vpop.f32.mrb[0].mxu0
      %v1887 = vadd.f32 %v1726, %v1886
      %v1888 = vpop.f32.mrb[0].mxu0
      %1889 = vmatprep.mubr.bf16.mxu0 %v985
      %1890 = vmatmul.mubr.bf16.gmra.mrb[0].mxu0 %v984
      %v1891 = vpop.f32.mrb[0].mxu0
      %v1892 = vadd.f32 %v1731, %v1891
      %v1893 = vpop.f32.mrb[0].mxu0
      %v1894 = vpop.f32.mrb[0].mxu0
      %v1895 = vadd.f32 %v1734, %v1894
      %v1896 = vpop.f32.mrb[0].mxu0
      %1897 = vmatprep.mubr.bf16.mxu0 %v994
      %1898 = vmatmul.mubr.bf16.gmra.mrb[0].mxu0 %v993
      %v1899 = vpop.f32.mrb[0].mxu0
      %v1900 = vadd.f32 %v1739, %v1899
      %v1901 = vpop.f32.mrb[0].mxu0
      %v1902 = vpop.f32.mrb[0].mxu0
      %v1903 = vadd.f32 %v1742, %v1902
      %v1904 = vpop.f32.mrb[0].mxu0
      %1905 = vmatprep.mubr.bf16.mxu0 %v1003
      %1906 = vmatmul.mubr.bf16.gmra.mrb[0].mxu0 %v1002
      %v1907 = vpop.f32.mrb[0].mxu0
      %v1908 = vadd.f32 %v1747, %v1907
      %v1909 = vpop.f32.mrb[0].mxu0
      %v1910 = vpop.f32.mrb[0].mxu0
      %v1911 = vadd.f32 %v1750, %v1910
      %v1912 = vpop.f32.mrb[0].mxu0
      %1913 = vmatprep.mubr.bf16.mxu0 %v1012
      %1914 = vmatmul.mubr.bf16.gmra.mrb[0].mxu0 %v1011
      %v1915 = vpop.f32.mrb[0].mxu0
      %v1916 = vadd.f32 %v1755, %v1915
      %v1917 = vpop.f32.mrb[0].mxu0
      %v1918 = vpop.f32.mrb[0].mxu0
      %v1919 = vadd.f32 %v1758, %v1918
      %v1920 = vpop.f32.mrb[0].mxu0
      %1921 = vmatprep.mubr.bf16.mxu0 %v1021
      %1922 = vmatmul.mubr.bf16.gmra.mrb[0].mxu0 %v1020
      %v1923 = vpop.f32.mrb[0].mxu0
      %v1924 = vadd.f32 %v1763, %v1923
      %v1925 = vpop.f32.mrb[0].mxu0
      %v1926 = vpop.f32.mrb[0].mxu0
      %v1927 = vadd.f32 %v1766, %v1926
      %v1928 = vpop.f32.mrb[0].mxu0
      %1929 = vmatprep.mubr.bf16.mxu0 %v1030
      %1930 = vmatmul.mubr.bf16.gmra.mrb[0].mxu0 %v1029
      %v1931 = vpop.f32.mrb[0].mxu0
      %v1932 = vadd.f32 %v1771, %v1931
      %v1933 = vpop.f32.mrb[0].mxu0
      %v1934 = vpop.f32.mrb[0].mxu0
      %v1935 = vadd.f32 %v1774, %v1934
      %v1936 = vpop.f32.mrb[0].mxu0
      %1937 = vmatprep.mubr.bf16.mxu0 %v1039
      %1938 = vmatmul.mubr.bf16.gmra.mrb[0].mxu0 %v1038
      %v1939 = vpop.f32.mrb[0].mxu0
      %v1940 = vadd.f32 %v1779, %v1939
      %v1941 = vpop.f32.mrb[0].mxu0
      %v1942 = vpop.f32.mrb[0].mxu0
      %v1943 = vadd.f32 %v1782, %v1942
      %v1944 = vpop.f32.mrb[0].mxu0
      %1945 = vmatprep.mubr.bf16.mxu0 %v1048
      %1946 = vmatmul.mubr.bf16.gmra.mrb[0].mxu0 %v1047
      %v1947 = vpop.f32.mrb[0].mxu0
      %v1948 = vadd.f32 %v1787, %v1947
      %v1949 = vpop.f32.mrb[0].mxu0
      %v1950 = vpop.f32.mrb[0].mxu0
      %v1951 = vadd.f32 %v1790, %v1950
      %v1952 = vpop.f32.mrb[0].mxu0
      %1953 = vmatprep.mubr.bf16.mxu0 %v1057
      %1954 = vmatmul.mubr.bf16.gmra.mrb[0].mxu0 %v1056
      %v1955 = vpop.f32.mrb[0].mxu0
      %v1956 = vadd.f32 %v1795, %v1955
      %v1957 = vpop.f32.mrb[0].mxu0
      %v1958 = vpop.f32.mrb[0].mxu0
      %v1959 = vadd.f32 %v1798, %v1958
      %v1960 = vpop.f32.mrb[0].mxu0
      %1961 = vmatprep.mubr.bf16.mxu0 %v1066
      %1962 = vmatmul.mubr.bf16.gmra.mrb[0].mxu0 %v1065
      %v1963 = vpop.f32.mrb[0].mxu0
      %v1964 = vadd.f32 %v1803, %v1963
      %v1965 = vpop.f32.mrb[0].mxu0
      %v1966 = vpop.f32.mrb[0].mxu0
      %v1967 = vadd.f32 %v1806, %v1966
      %v1968 = vpop.f32.mrb[0].mxu0
      %1969 = vdwg.mxu0
      %1970 = vmatprep.subr.bf16.mxu0 0
      %1971 = vmatpush1.bf16.msra.mxu0 %v1536
      %1972 = vmatprep.subr.bf16.mxu0 0
      %1973 = vmatpush1.bf16.msra.mxu0 %v1537
      %1974 = vmatprep.subr.bf16.mxu0 0
      %1975 = vmatpush1.bf16.msra.mxu0 %v1538
      %1976 = vmatprep.subr.bf16.mxu0 0
      %1977 = vmatpush1.bf16.msra.mxu0 %v1539
      %1978 = vmatprep.subr.bf16.mxu0 0
      %1979 = vmatpush1.bf16.msra.mxu0 %v1540
      %1980 = vmatprep.subr.bf16.mxu0 0
      %1981 = vmatpush1.bf16.msra.mxu0 %v1541
      %1982 = vmatprep.subr.bf16.mxu0 0
      %1983 = vmatpush1.bf16.msra.mxu0 %v1542
      %1984 = vmatprep.subr.bf16.mxu0 0
      %1985 = vmatpush1.bf16.msra.mxu0 %v1543
      %1986 = vmatprep.subr.bf16.mxu0 0
      %1987 = vmatpush1.bf16.msra.mxu0 %v1544
      %1988 = vmatprep.subr.bf16.mxu0 0
      %1989 = vmatpush1.bf16.msra.mxu0 %v1545
      %1990 = vmatprep.subr.bf16.mxu0 0
      %1991 = vmatpush1.bf16.msra.mxu0 %v1546
      %1992 = vmatprep.subr.bf16.mxu0 0
      %1993 = vmatpush1.bf16.msra.mxu0 %v1547
      %1994 = vmatprep.subr.bf16.mxu0 0
      %1995 = vmatpush1.bf16.msra.mxu0 %v1548
      %1996 = vmatprep.subr.bf16.mxu0 0
      %1997 = vmatpush1.bf16.msra.mxu0 %v1549
      %1998 = vmatprep.subr.bf16.mxu0 0
      %1999 = vmatpush1.bf16.msra.mxu0 %v1550
      %2000 = vmatprep.subr.bf16.mxu0 0
      %2001 = vmatpush1.bf16.msra.mxu0 %v1551
      %2002 = vmatprep.mubr.bf16.mxu0 %v933
      %2003 = vmatmul.mubr.bf16.gmra.mrb[0].mxu0 %v932
      %v2004 = vpop.f32.mrb[0].mxu0
      %v2005 = vadd.f32 %v1844, %v2004
      %v2006 = vpop.f32.mrb[0].mxu0
      %v2007 = vpop.f32.mrb[0].mxu0
      %v2008 = vadd.f32 %v1847, %v2007
      %v2009 = vpop.f32.mrb[0].mxu0
      %2010 = vmatprep.mubr.bf16.mxu0 %v942
      %2011 = vmatmul.mubr.bf16.gmra.mrb[0].mxu0 %v941
      %v2012 = vpop.f32.mrb[0].mxu0
      %v2013 = vadd.f32 %v1852, %v2012
      %v2014 = vpop.f32.mrb[0].mxu0
      %v2015 = vpop.f32.mrb[0].mxu0
      %v2016 = vadd.f32 %v1855, %v2015
      %v2017 = vpop.f32.mrb[0].mxu0
      %2018 = vmatprep.mubr.bf16.mxu0 %v951
      %2019 = vmatmul.mubr.bf16.gmra.mrb[0].mxu0 %v950
      %v2020 = vpop.f32.mrb[0].mxu0
      %v2021 = vadd.f32 %v1860, %v2020
      %v2022 = vpop.f32.mrb[0].mxu0
      %v2023 = vpop.f32.mrb[0].mxu0
      %v2024 = vadd.f32 %v1863, %v2023
      %v2025 = vpop.f32.mrb[0].mxu0
      %2026 = vmatprep.mubr.bf16.mxu0 %v960
      %2027 = vmatmul.mubr.bf16.gmra.mrb[0].mxu0 %v959
      %v2028 = vpop.f32.mrb[0].mxu0
      %v2029 = vadd.f32 %v1868, %v2028
      %v2030 = vpop.f32.mrb[0].mxu0
      %v2031 = vpop.f32.mrb[0].mxu0
      %v2032 = vadd.f32 %v1871, %v2031
      %v2033 = vpop.f32.mrb[0].mxu0
      %2034 = vmatprep.mubr.bf16.mxu0 %v969
      %2035 = vmatmul.mubr.bf16.gmra.mrb[0].mxu0 %v968
      %v2036 = vpop.f32.mrb[0].mxu0
      %v2037 = vadd.f32 %v1876, %v2036
      %v2038 = vpop.f32.mrb[0].mxu0
      %v2039 = vpop.f32.mrb[0].mxu0
      %v2040 = vadd.f32 %v1879, %v2039
      %v2041 = vpop.f32.mrb[0].mxu0
      %2042 = vmatprep.mubr.bf16.mxu0 %v978
      %2043 = vmatmul.mubr.bf16.gmra.mrb[0].mxu0 %v977
      %v2044 = vpop.f32.mrb[0].mxu0
      %v2045 = vadd.f32 %v1884, %v2044
      %v2046 = vpop.f32.mrb[0].mxu0
      %v2047 = vpop.f32.mrb[0].mxu0
      %v2048 = vadd.f32 %v1887, %v2047
      %v2049 = vpop.f32.mrb[0].mxu0
      %2050 = vmatprep.mubr.bf16.mxu0 %v987
      %2051 = vmatmul.mubr.bf16.gmra.mrb[0].mxu0 %v986
      %v2052 = vpop.f32.mrb[0].mxu0
      %v2053 = vadd.f32 %v1892, %v2052
      %v2054 = vpop.f32.mrb[0].mxu0
      %v2055 = vpop.f32.mrb[0].mxu0
      %v2056 = vadd.f32 %v1895, %v2055
      %v2057 = vpop.f32.mrb[0].mxu0
      %2058 = vmatprep.mubr.bf16.mxu0 %v996
      %2059 = vmatmul.mubr.bf16.gmra.mrb[0].mxu0 %v995
      %v2060 = vpop.f32.mrb[0].mxu0
      %v2061 = vadd.f32 %v1900, %v2060
      %v2062 = vpop.f32.mrb[0].mxu0
      %v2063 = vpop.f32.mrb[0].mxu0
      %v2064 = vadd.f32 %v1903, %v2063
      %v2065 = vpop.f32.mrb[0].mxu0
      %2066 = vmatprep.mubr.bf16.mxu0 %v1005
      %2067 = vmatmul.mubr.bf16.gmra.mrb[0].mxu0 %v1004
      %v2068 = vpop.f32.mrb[0].mxu0
      %v2069 = vadd.f32 %v1908, %v2068
      %v2070 = vpop.f32.mrb[0].mxu0
      %v2071 = vpop.f32.mrb[0].mxu0
      %v2072 = vadd.f32 %v1911, %v2071
      %v2073 = vpop.f32.mrb[0].mxu0
      %2074 = vmatprep.mubr.bf16.mxu0 %v1014
      %2075 = vmatmul.mubr.bf16.gmra.mrb[0].mxu0 %v1013
      %v2076 = vpop.f32.mrb[0].mxu0
      %v2077 = vadd.f32 %v1916, %v2076
      %v2078 = vpop.f32.mrb[0].mxu0
      %v2079 = vpop.f32.mrb[0].mxu0
      %v2080 = vadd.f32 %v1919, %v2079
      %v2081 = vpop.f32.mrb[0].mxu0
      %2082 = vmatprep.mubr.bf16.mxu0 %v1023
      %2083 = vmatmul.mubr.bf16.gmra.mrb[0].mxu0 %v1022
      %v2084 = vpop.f32.mrb[0].mxu0
      %v2085 = vadd.f32 %v1924, %v2084
      %v2086 = vpop.f32.mrb[0].mxu0
      %v2087 = vpop.f32.mrb[0].mxu0
      %v2088 = vadd.f32 %v1927, %v2087
      %v2089 = vpop.f32.mrb[0].mxu0
      %2090 = vmatprep.mubr.bf16.mxu0 %v1032
      %2091 = vmatmul.mubr.bf16.gmra.mrb[0].mxu0 %v1031
      %v2092 = vpop.f32.mrb[0].mxu0
      %v2093 = vadd.f32 %v1932, %v2092
      %v2094 = vpop.f32.mrb[0].mxu0
      %v2095 = vpop.f32.mrb[0].mxu0
      %v2096 = vadd.f32 %v1935, %v2095
      %v2097 = vpop.f32.mrb[0].mxu0
      %2098 = vmatprep.mubr.bf16.mxu0 %v1041
      %2099 = vmatmul.mubr.bf16.gmra.mrb[0].mxu0 %v1040
      %v2100 = vpop.f32.mrb[0].mxu0
      %v2101 = vadd.f32 %v1940, %v2100
      %v2102 = vpop.f32.mrb[0].mxu0
      %v2103 = vpop.f32.mrb[0].mxu0
      %v2104 = vadd.f32 %v1943, %v2103
      %v2105 = vpop.f32.mrb[0].mxu0
      %2106 = vmatprep.mubr.bf16.mxu0 %v1050
      %2107 = vmatmul.mubr.bf16.gmra.mrb[0].mxu0 %v1049
      %v2108 = vpop.f32.mrb[0].mxu0
      %v2109 = vadd.f32 %v1948, %v2108
      %v2110 = vpop.f32.mrb[0].mxu0
      %v2111 = vpop.f32.mrb[0].mxu0
      %v2112 = vadd.f32 %v1951, %v2111
      %v2113 = vpop.f32.mrb[0].mxu0
      %2114 = vmatprep.mubr.bf16.mxu0 %v1059
      %2115 = vmatmul.mubr.bf16.gmra.mrb[0].mxu0 %v1058
      %v2116 = vpop.f32.mrb[0].mxu0
      %v2117 = vadd.f32 %v1956, %v2116
      %v2118 = vpop.f32.mrb[0].mxu0
      %v2119 = vpop.f32.mrb[0].mxu0
      %v2120 = vadd.f32 %v1959, %v2119
      %v2121 = vpop.f32.mrb[0].mxu0
      %2122 = vmatprep.mubr.bf16.mxu0 %v1068
      %2123 = vmatmul.mubr.bf16.gmra.mrb[0].mxu0 %v1067
      %v2124 = vpop.f32.mrb[0].mxu0
      %v2125 = vadd.f32 %v1964, %v2124
      %v2126 = vpop.f32.mrb[0].mxu0
      %v2127 = vpop.f32.mrb[0].mxu0
      %v2128 = vadd.f32 %v1967, %v2127
      %v2129 = vpop.f32.mrb[0].mxu0
      %2130 = vdwg.mxu0
      %2131 = vmatprep.subr.bf16.mxu0 0
      %2132 = vmatpush1.bf16.msra.mxu0 %v1552
      %2133 = vmatprep.subr.bf16.mxu0 0
      %2134 = vmatpush1.bf16.msra.mxu0 %v1553
      %2135 = vmatprep.subr.bf16.mxu0 0
      %2136 = vmatpush1.bf16.msra.mxu0 %v1554
      %2137 = vmatprep.subr.bf16.mxu0 0
      %2138 = vmatpush1.bf16.msra.mxu0 %v1555
      %2139 = vmatprep.subr.bf16.mxu0 0
      %2140 = vmatpush1.bf16.msra.mxu0 %v1556
      %2141 = vmatprep.subr.bf16.mxu0 0
      %2142 = vmatpush1.bf16.msra.mxu0 %v1557
      %2143 = vmatprep.subr.bf16.mxu0 0
      %2144 = vmatpush1.bf16.msra.mxu0 %v1558
      %2145 = vmatprep.subr.bf16.mxu0 0
      %2146 = vmatpush1.bf16.msra.mxu0 %v1559
      %2147 = vmatprep.subr.bf16.mxu0 0
      %2148 = vmatpush1.bf16.msra.mxu0 %v1560
      %2149 = vmatprep.subr.bf16.mxu0 0
      %2150 = vmatpush1.bf16.msra.mxu0 %v1561
      %2151 = vmatprep.subr.bf16.mxu0 0
      %2152 = vmatpush1.bf16.msra.mxu0 %v1562
      %2153 = vmatprep.subr.bf16.mxu0 0
      %2154 = vmatpush1.bf16.msra.mxu0 %v1563
      %2155 = vmatprep.subr.bf16.mxu0 0
      %2156 = vmatpush1.bf16.msra.mxu0 %v1564
      %2157 = vmatprep.subr.bf16.mxu0 0
      %2158 = vmatpush1.bf16.msra.mxu0 %v1565
      %2159 = vmatprep.subr.bf16.mxu0 0
      %2160 = vmatpush1.bf16.msra.mxu0 %v1566
      %2161 = vmatprep.subr.bf16.mxu0 0
      %2162 = vmatpush1.bf16.msra.mxu0 %v1567
      %2163 = vmatprep.mubr.bf16.mxu0 %v935
      %2164 = vmatmul.mubr.bf16.gmra.mrb[0].mxu0 %v934
      %v2165 = vpop.f32.mrb[0].mxu0
      %v2166 = vadd.f32 %v2005, %v2165
      %v2167 = vpop.f32.mrb[0].mxu0
      %v2168 = vpop.f32.mrb[0].mxu0
      %v2169 = vadd.f32 %v2008, %v2168
      %v2170 = vpop.f32.mrb[0].mxu0
      %2171 = vmatprep.mubr.bf16.mxu0 %v944
      %2172 = vmatmul.mubr.bf16.gmra.mrb[0].mxu0 %v943
      %v2173 = vpop.f32.mrb[0].mxu0
      %v2174 = vadd.f32 %v2013, %v2173
      %v2175 = vpop.f32.mrb[0].mxu0
      %v2176 = vpop.f32.mrb[0].mxu0
      %v2177 = vadd.f32 %v2016, %v2176
      %v2178 = vpop.f32.mrb[0].mxu0
      %2179 = vmatprep.mubr.bf16.mxu0 %v953
      %2180 = vmatmul.mubr.bf16.gmra.mrb[0].mxu0 %v952
      %v2181 = vpop.f32.mrb[0].mxu0
      %v2182 = vadd.f32 %v2021, %v2181
      %v2183 = vpop.f32.mrb[0].mxu0
      %v2184 = vpop.f32.mrb[0].mxu0
      %v2185 = vadd.f32 %v2024, %v2184
      %v2186 = vpop.f32.mrb[0].mxu0
      %2187 = vmatprep.mubr.bf16.mxu0 %v962
      %2188 = vmatmul.mubr.bf16.gmra.mrb[0].mxu0 %v961
      %v2189 = vpop.f32.mrb[0].mxu0
      %v2190 = vadd.f32 %v2029, %v2189
      %v2191 = vpop.f32.mrb[0].mxu0
      %v2192 = vpop.f32.mrb[0].mxu0
      %v2193 = vadd.f32 %v2032, %v2192
      %v2194 = vpop.f32.mrb[0].mxu0
      %2195 = vmatprep.mubr.bf16.mxu0 %v971
      %2196 = vmatmul.mubr.bf16.gmra.mrb[0].mxu0 %v970
      %v2197 = vpop.f32.mrb[0].mxu0
      %v2198 = vadd.f32 %v2037, %v2197
      %v2199 = vpop.f32.mrb[0].mxu0
      %v2200 = vpop.f32.mrb[0].mxu0
      %v2201 = vadd.f32 %v2040, %v2200
      %v2202 = vpop.f32.mrb[0].mxu0
      %2203 = vmatprep.mubr.bf16.mxu0 %v980
      %2204 = vmatmul.mubr.bf16.gmra.mrb[0].mxu0 %v979
      %v2205 = vpop.f32.mrb[0].mxu0
      %v2206 = vadd.f32 %v2045, %v2205
      %v2207 = vpop.f32.mrb[0].mxu0
      %v2208 = vpop.f32.mrb[0].mxu0
      %v2209 = vadd.f32 %v2048, %v2208
      %v2210 = vpop.f32.mrb[0].mxu0
      %2211 = vmatprep.mubr.bf16.mxu0 %v989
      %2212 = vmatmul.mubr.bf16.gmra.mrb[0].mxu0 %v988
      %v2213 = vpop.f32.mrb[0].mxu0
      %v2214 = vadd.f32 %v2053, %v2213
      %v2215 = vpop.f32.mrb[0].mxu0
      %v2216 = vpop.f32.mrb[0].mxu0
      %v2217 = vadd.f32 %v2056, %v2216
      %v2218 = vpop.f32.mrb[0].mxu0
      %2219 = vmatprep.mubr.bf16.mxu0 %v998
      %2220 = vmatmul.mubr.bf16.gmra.mrb[0].mxu0 %v997
      %v2221 = vpop.f32.mrb[0].mxu0
      %v2222 = vadd.f32 %v2061, %v2221
      %v2223 = vpop.f32.mrb[0].mxu0
      %v2224 = vpop.f32.mrb[0].mxu0
      %v2225 = vadd.f32 %v2064, %v2224
      %v2226 = vpop.f32.mrb[0].mxu0
      %2227 = vmatprep.mubr.bf16.mxu0 %v1007
      %2228 = vmatmul.mubr.bf16.gmra.mrb[0].mxu0 %v1006
      %v2229 = vpop.f32.mrb[0].mxu0
      %v2230 = vadd.f32 %v2069, %v2229
      %v2231 = vpop.f32.mrb[0].mxu0
      %v2232 = vpop.f32.mrb[0].mxu0
      %v2233 = vadd.f32 %v2072, %v2232
      %v2234 = vpop.f32.mrb[0].mxu0
      %2235 = vmatprep.mubr.bf16.mxu0 %v1016
      %2236 = vmatmul.mubr.bf16.gmra.mrb[0].mxu0 %v1015
      %v2237 = vpop.f32.mrb[0].mxu0
      %v2238 = vadd.f32 %v2077, %v2237
      %v2239 = vpop.f32.mrb[0].mxu0
      %v2240 = vpop.f32.mrb[0].mxu0
      %v2241 = vadd.f32 %v2080, %v2240
      %v2242 = vpop.f32.mrb[0].mxu0
      %2243 = vmatprep.mubr.bf16.mxu0 %v1025
      %2244 = vmatmul.mubr.bf16.gmra.mrb[0].mxu0 %v1024
      %v2245 = vpop.f32.mrb[0].mxu0
      %v2246 = vadd.f32 %v2085, %v2245
      %v2247 = vpop.f32.mrb[0].mxu0
      %v2248 = vpop.f32.mrb[0].mxu0
      %v2249 = vadd.f32 %v2088, %v2248
      %v2250 = vpop.f32.mrb[0].mxu0
      %2251 = vmatprep.mubr.bf16.mxu0 %v1034
      %2252 = vmatmul.mubr.bf16.gmra.mrb[0].mxu0 %v1033
      %v2253 = vpop.f32.mrb[0].mxu0
      %v2254 = vadd.f32 %v2093, %v2253
      %v2255 = vpop.f32.mrb[0].mxu0
      %v2256 = vpop.f32.mrb[0].mxu0
      %v2257 = vadd.f32 %v2096, %v2256
      %v2258 = vpop.f32.mrb[0].mxu0
      %2259 = vmatprep.mubr.bf16.mxu0 %v1043
      %2260 = vmatmul.mubr.bf16.gmra.mrb[0].mxu0 %v1042
      %v2261 = vpop.f32.mrb[0].mxu0
      %v2262 = vadd.f32 %v2101, %v2261
      %v2263 = vpop.f32.mrb[0].mxu0
      %v2264 = vpop.f32.mrb[0].mxu0
      %v2265 = vadd.f32 %v2104, %v2264
      %v2266 = vpop.f32.mrb[0].mxu0
      %2267 = vmatprep.mubr.bf16.mxu0 %v1052
      %2268 = vmatmul.mubr.bf16.gmra.mrb[0].mxu0 %v1051
      %v2269 = vpop.f32.mrb[0].mxu0
      %v2270 = vadd.f32 %v2109, %v2269
      %v2271 = vpop.f32.mrb[0].mxu0
      %v2272 = vpop.f32.mrb[0].mxu0
      %v2273 = vadd.f32 %v2112, %v2272
      %v2274 = vpop.f32.mrb[0].mxu0
      %2275 = vmatprep.mubr.bf16.mxu0 %v1061
      %2276 = vmatmul.mubr.bf16.gmra.mrb[0].mxu0 %v1060
      %v2277 = vpop.f32.mrb[0].mxu0
      %v2278 = vadd.f32 %v2117, %v2277
      %v2279 = vpop.f32.mrb[0].mxu0
      %v2280 = vpop.f32.mrb[0].mxu0
      %v2281 = vadd.f32 %v2120, %v2280
      %v2282 = vpop.f32.mrb[0].mxu0
      %2283 = vmatprep.mubr.bf16.mxu0 %v1070
      %2284 = vmatmul.mubr.bf16.gmra.mrb[0].mxu0 %v1069
      %v2285 = vpop.f32.mrb[0].mxu0
      %v2286 = vadd.f32 %v2125, %v2285
      %v2287 = vpop.f32.mrb[0].mxu0
      %v2288 = vpop.f32.mrb[0].mxu0
      %v2289 = vadd.f32 %v2128, %v2288
      %v2290 = vpop.f32.mrb[0].mxu0
      %2291 = vdwg.mxu0
      %2292 = vmatprep.subr.bf16.mxu0 0
      %2293 = vmatpush1.bf16.msra.mxu0 %v1568
      %2294 = vmatprep.subr.bf16.mxu0 0
      %2295 = vmatpush1.bf16.msra.mxu0 %v1569
      %2296 = vmatprep.subr.bf16.mxu0 0
      %2297 = vmatpush1.bf16.msra.mxu0 %v1570
      %2298 = vmatprep.subr.bf16.mxu0 0
      %2299 = vmatpush1.bf16.msra.mxu0 %v1571
      %2300 = vmatprep.subr.bf16.mxu0 0
      %2301 = vmatpush1.bf16.msra.mxu0 %v1572
      %2302 = vmatprep.subr.bf16.mxu0 0
      %2303 = vmatpush1.bf16.msra.mxu0 %v1573
      %2304 = vmatprep.subr.bf16.mxu0 0
      %2305 = vmatpush1.bf16.msra.mxu0 %v1574
      %2306 = vmatprep.subr.bf16.mxu0 0
      %2307 = vmatpush1.bf16.msra.mxu0 %v1575
      %2308 = vmatprep.subr.bf16.mxu0 0
      %2309 = vmatpush1.bf16.msra.mxu0 0
      %2310 = vmatprep.subr.bf16.mxu0 0
      %2311 = vmatpush1.bf16.msra.mxu0 0
      %2312 = vmatprep.subr.bf16.mxu0 0
      %2313 = vmatpush1.bf16.msra.mxu0 0
      %2314 = vmatprep.subr.bf16.mxu0 0
      %2315 = vmatpush1.bf16.msra.mxu0 0
      %2316 = vmatprep.subr.bf16.mxu0 0
      %2317 = vmatpush1.bf16.msra.mxu0 0
      %2318 = vmatprep.subr.bf16.mxu0 0
      %2319 = vmatpush1.bf16.msra.mxu0 0
      %2320 = vmatprep.subr.bf16.mxu0 0
      %2321 = vmatpush1.bf16.msra.mxu0 0
      %2322 = vmatprep.subr.bf16.mxu0 0
      %2323 = vmatpush1.bf16.msra.mxu0 0
      %2324 = vmatprep.mubr.bf16.mxu0 0
      %2325 = vmatmul.mubr.bf16.gmra.mrb[0].mxu0 %v936
      %v2326 = vpop.f32.mrb[0].mxu0
      %v2327 = vadd.f32 %v2166, %v2326
      %v2328 = vpop.f32.mrb[0].mxu0
      %v2329 = vpop.f32.mrb[0].mxu0
      %v2330 = vadd.f32 %v2169, %v2329
      %v2331 = vpop.f32.mrb[0].mxu0
      %2332 = vmatprep.mubr.bf16.mxu0 0
      %2333 = vmatmul.mubr.bf16.gmra.mrb[0].mxu0 %v945
      %v2334 = vpop.f32.mrb[0].mxu0
      %v2335 = vadd.f32 %v2174, %v2334
      %v2336 = vpop.f32.mrb[0].mxu0
      %v2337 = vpop.f32.mrb[0].mxu0
      %v2338 = vadd.f32 %v2177, %v2337
      %v2339 = vpop.f32.mrb[0].mxu0
      %2340 = vmatprep.mubr.bf16.mxu0 0
      %2341 = vmatmul.mubr.bf16.gmra.mrb[0].mxu0 %v954
      %v2342 = vpop.f32.mrb[0].mxu0
      %v2343 = vadd.f32 %v2182, %v2342
      %v2344 = vpop.f32.mrb[0].mxu0
      %v2345 = vpop.f32.mrb[0].mxu0
      %v2346 = vadd.f32 %v2185, %v2345
      %v2347 = vpop.f32.mrb[0].mxu0
      %2348 = vmatprep.mubr.bf16.mxu0 0
      %2349 = vmatmul.mubr.bf16.gmra.mrb[0].mxu0 %v963
      %v2350 = vpop.f32.mrb[0].mxu0
      %v2351 = vadd.f32 %v2190, %v2350
      %v2352 = vpop.f32.mrb[0].mxu0
      %v2353 = vpop.f32.mrb[0].mxu0
      %v2354 = vadd.f32 %v2193, %v2353
      %v2355 = vpop.f32.mrb[0].mxu0
      %2356 = vmatprep.mubr.bf16.mxu0 0
      %2357 = vmatmul.mubr.bf16.gmra.mrb[0].mxu0 %v972
      %v2358 = vpop.f32.mrb[0].mxu0
      %v2359 = vadd.f32 %v2198, %v2358
      %v2360 = vpop.f32.mrb[0].mxu0
      %v2361 = vpop.f32.mrb[0].mxu0
      %v2362 = vadd.f32 %v2201, %v2361
      %v2363 = vpop.f32.mrb[0].mxu0
      %2364 = vmatprep.mubr.bf16.mxu0 0
      %2365 = vmatmul.mubr.bf16.gmra.mrb[0].mxu0 %v981
      %v2366 = vpop.f32.mrb[0].mxu0
      %v2367 = vadd.f32 %v2206, %v2366
      %v2368 = vpop.f32.mrb[0].mxu0
      %v2369 = vpop.f32.mrb[0].mxu0
      %v2370 = vadd.f32 %v2209, %v2369
      %v2371 = vpop.f32.mrb[0].mxu0
      %2372 = vmatprep.mubr.bf16.mxu0 0
      %2373 = vmatmul.mubr.bf16.gmra.mrb[0].mxu0 %v990
      %v2374 = vpop.f32.mrb[0].mxu0
      %v2375 = vadd.f32 %v2214, %v2374
      %v2376 = vpop.f32.mrb[0].mxu0
      %v2377 = vpop.f32.mrb[0].mxu0
      %v2378 = vadd.f32 %v2217, %v2377
      %v2379 = vpop.f32.mrb[0].mxu0
      %2380 = vmatprep.mubr.bf16.mxu0 0
      %2381 = vmatmul.mubr.bf16.gmra.mrb[0].mxu0 %v999
      %v2382 = vpop.f32.mrb[0].mxu0
      %v2383 = vadd.f32 %v2222, %v2382
      %v2384 = vpop.f32.mrb[0].mxu0
      %v2385 = vpop.f32.mrb[0].mxu0
      %v2386 = vadd.f32 %v2225, %v2385
      %v2387 = vpop.f32.mrb[0].mxu0
      %2388 = vmatprep.mubr.bf16.mxu0 0
      %2389 = vmatmul.mubr.bf16.gmra.mrb[0].mxu0 %v1008
      %v2390 = vpop.f32.mrb[0].mxu0
      %v2391 = vadd.f32 %v2230, %v2390
      %v2392 = vpop.f32.mrb[0].mxu0
      %v2393 = vpop.f32.mrb[0].mxu0
      %v2394 = vadd.f32 %v2233, %v2393
      %v2395 = vpop.f32.mrb[0].mxu0
      %2396 = vmatprep.mubr.bf16.mxu0 0
      %2397 = vmatmul.mubr.bf16.gmra.mrb[0].mxu0 %v1017
      %v2398 = vpop.f32.mrb[0].mxu0
      %v2399 = vadd.f32 %v2238, %v2398
      %v2400 = vpop.f32.mrb[0].mxu0
      %v2401 = vpop.f32.mrb[0].mxu0
      %v2402 = vadd.f32 %v2241, %v2401
      %v2403 = vpop.f32.mrb[0].mxu0
      %2404 = vmatprep.mubr.bf16.mxu0 0
      %2405 = vmatmul.mubr.bf16.gmra.mrb[0].mxu0 %v1026
      %v2406 = vpop.f32.mrb[0].mxu0
      %v2407 = vadd.f32 %v2246, %v2406
      %v2408 = vpop.f32.mrb[0].mxu0
      %v2409 = vpop.f32.mrb[0].mxu0
      %v2410 = vadd.f32 %v2249, %v2409
      %v2411 = vpop.f32.mrb[0].mxu0
      %2412 = vmatprep.mubr.bf16.mxu0 0
      %2413 = vmatmul.mubr.bf16.gmra.mrb[0].mxu0 %v1035
      %v2414 = vpop.f32.mrb[0].mxu0
      %v2415 = vadd.f32 %v2254, %v2414
      %v2416 = vpop.f32.mrb[0].mxu0
      %v2417 = vpop.f32.mrb[0].mxu0
      %v2418 = vadd.f32 %v2257, %v2417
      %v2419 = vpop.f32.mrb[0].mxu0
      %2420 = vmatprep.mubr.bf16.mxu0 0
      %2421 = vmatmul.mubr.bf16.gmra.mrb[0].mxu0 %v1044
      %v2422 = vpop.f32.mrb[0].mxu0
      %v2423 = vadd.f32 %v2262, %v2422
      %v2424 = vpop.f32.mrb[0].mxu0
      %v2425 = vpop.f32.mrb[0].mxu0
      %v2426 = vadd.f32 %v2265, %v2425
      %v2427 = vpop.f32.mrb[0].mxu0
      %2428 = vmatprep.mubr.bf16.mxu0 0
      %2429 = vmatmul.mubr.bf16.gmra.mrb[0].mxu0 %v1053
      %v2430 = vpop.f32.mrb[0].mxu0
      %v2431 = vadd.f32 %v2270, %v2430
      %v2432 = vpop.f32.mrb[0].mxu0
      %v2433 = vpop.f32.mrb[0].mxu0
      %v2434 = vadd.f32 %v2273, %v2433
      %v2435 = vpop.f32.mrb[0].mxu0
      %2436 = vmatprep.mubr.bf16.mxu0 0
      %2437 = vmatmul.mubr.bf16.gmra.mrb[0].mxu0 %v1062
      %v2438 = vpop.f32.mrb[0].mxu0
      %v2439 = vadd.f32 %v2278, %v2438
      %v2440 = vpop.f32.mrb[0].mxu0
      %v2441 = vpop.f32.mrb[0].mxu0
      %v2442 = vadd.f32 %v2281, %v2441
      %v2443 = vpop.f32.mrb[0].mxu0
      %2444 = vmatprep.mubr.bf16.mxu0 0
      %2445 = vmatmul.mubr.bf16.gmra.mrb[0].mxu0 %v1071
      %v2446 = vpop.f32.mrb[0].mxu0
      %v2447 = vadd.f32 %v2286, %v2446
      %v2448 = vpop.f32.mrb[0].mxu0
      %v2449 = vpop.f32.mrb[0].mxu0
      %v2450 = vadd.f32 %v2289, %v2449
      %v2451 = vpop.f32.mrb[0].mxu0
      %2452 = vdwg.mxu0
      %2453 = vst [vmem:[%s173] sm:$0xff] %v2327
      %2454 = vst [vmem:[%s173 + $0x8] sm:$0xff] %v2330
      %2455 = vst [vmem:[%s173 + $0x10] sm:$0xff] %v2335
      %2456 = vst [vmem:[%s173 + $0x18] sm:$0xff] %v2338
      %2457 = vst [vmem:[%s173 + $0x20] sm:$0xff] %v2343
      %2458 = vst [vmem:[%s173 + $0x28] sm:$0xff] %v2346
      %2459 = vst [vmem:[%s173 + $0x30] sm:$0xff] %v2351
      %2460 = vst [vmem:[%s173 + $0x38] sm:$0xff] %v2354
      %2461 = vst [vmem:[%s173 + $0x40] sm:$0xff] %v2359
      %2462 = vst [vmem:[%s173 + $0x48] sm:$0xff] %v2362
      %2463 = vst [vmem:[%s173 + $0x50] sm:$0xff] %v2367
      %2464 = vst [vmem:[%s173 + $0x58] sm:$0xff] %v2370
      %2465 = vst [vmem:[%s173 + $0x60] sm:$0xff] %v2375
      %2466 = vst [vmem:[%s173 + $0x68] sm:$0xff] %v2378
      %2467 = vst [vmem:[%s173 + $0x70] sm:$0xff] %v2383
      %2468 = vst [vmem:[%s173 + $0x78] sm:$0xff] %v2386
      %2469 = vst [vmem:[%s173 + $0x80] sm:$0xff] %v2391
      %2470 = vst [vmem:[%s173 + $0x88] sm:$0xff] %v2394
      %2471 = vst [vmem:[%s173 + $0x90] sm:$0xff] %v2399
      %2472 = vst [vmem:[%s173 + $0x98] sm:$0xff] %v2402
      %2473 = vst [vmem:[%s173 + $0xa0] sm:$0xff] %v2407
      %2474 = vst [vmem:[%s173 + $0xa8] sm:$0xff] %v2410
      %2475 = vst [vmem:[%s173 + $0xb0] sm:$0xff] %v2415
      %2476 = vst [vmem:[%s173 + $0xb8] sm:$0xff] %v2418
      %2477 = vst [vmem:[%s173 + $0xc0] sm:$0xff] %v2423
      %2478 = vst [vmem:[%s173 + $0xc8] sm:$0xff] %v2426
      %2479 = vst [vmem:[%s173 + $0xd0] sm:$0xff] %v2431
      %2480 = vst [vmem:[%s173 + $0xd8] sm:$0xff] %v2434
      %2481 = vst [vmem:[%s173 + $0xe0] sm:$0xff] %v2439
      %2482 = vst [vmem:[%s173 + $0xe8] sm:$0xff] %v2442
      %2483 = vst [vmem:[%s173 + $0xf0] sm:$0xff] %v2447
      %2484 = vst [vmem:[%s173 + $0xf8] sm:$0xff] %v2450
      %p2485 = scmp.eq.s32.totalorder %s15, 0
      // Predicated region
      $region29: #{c5_head_forward.2} parent=27 // pred_check
        %p2486 = pneg %p2485
      $region30: #{c5_head_forward.2} parent=27 // pred_check_branch
        %2488 = sbr.rel (%p2486) target = $region32
      $region31: #{c5_head_forward.2} parent=27 // pred_region
        %2489 = vst [vmem:[%s3] sm:$0x3] 0.0
      $region32: #{c5_head_forward.2} parent=27 // pred_fallthru
        _
      %v2490 = vadd.f32 %v2327, %v2330
      %v2491 = vadd.f32 %v2490, %v2335
      %v2492 = vadd.f32 %v2491, %v2338
      %v2493 = vadd.f32 %v2492, %v2343
      %v2494 = vadd.f32 %v2493, %v2346
      %v2495 = vadd.f32 %v2494, %v2351
      %v2496 = vadd.f32 %v2495, %v2354
      %v2497 = vadd.f32 %v2496, %v2359
      %v2498 = vadd.f32 %v2497, %v2362
      %v2499 = vadd.f32 %v2498, %v2367
      %v2500 = vadd.f32 %v2499, %v2370
      %v2501 = vadd.f32 %v2500, %v2375
      %v2502 = vadd.f32 %v2501, %v2378
      %v2503 = vadd.f32 %v2502, %v2383
      %v2504 = vadd.f32 %v2503, %v2386
      %v2505 = vadd.f32 %v2504, %v2391
      %v2506 = vadd.f32 %v2505, %v2394
      %v2507 = vadd.f32 %v2506, %v2399
      %v2508 = vadd.f32 %v2507, %v2402
      %v2509 = vadd.f32 %v2508, %v2407
      %v2510 = vadd.f32 %v2509, %v2410
      %v2511 = vadd.f32 %v2510, %v2415
      %v2512 = vadd.f32 %v2511, %v2418
      %v2513 = vadd.f32 %v2512, %v2423
      %v2514 = vadd.f32 %v2513, %v2426
      %v2515 = vadd.f32 %v2514, %v2431
      %v2516 = vadd.f32 %v2515, %v2434
      %v2517 = vadd.f32 %v2516, %v2439
      %v2518 = vadd.f32 %v2517, %v2442
      %v2519 = vadd.f32 %v2518, %v2447
      %v2520 = vadd.f32 %v2519, %v2450
      %v2521 = vrot.slane %v2520, 4
      %v2522 = vadd.f32 %v2520, %v2521
      %v2523 = vrot.slane %v2522, 2
      %v2524 = vadd.f32 %v2522, %v2523
      %v2525 = vrot.slane %v2524, 1
      %v2526 = vadd.f32 %v2524, %v2525
      %v2527 = vmul.f32 %v2327, %v2327
      %v2528 = vmul.f32 %v2330, %v2330
      %v2529 = vmul.f32 %v2335, %v2335
      %v2530 = vmul.f32 %v2338, %v2338
      %v2531 = vmul.f32 %v2343, %v2343
      %v2532 = vmul.f32 %v2346, %v2346
      %v2533 = vmul.f32 %v2351, %v2351
      %v2534 = vmul.f32 %v2354, %v2354
      %v2535 = vmul.f32 %v2359, %v2359
      %v2536 = vmul.f32 %v2362, %v2362
      %v2537 = vmul.f32 %v2367, %v2367
      %v2538 = vmul.f32 %v2370, %v2370
      %v2539 = vmul.f32 %v2375, %v2375
      %v2540 = vmul.f32 %v2378, %v2378
      %v2541 = vmul.f32 %v2383, %v2383
      %v2542 = vmul.f32 %v2386, %v2386
      %v2543 = vmul.f32 %v2391, %v2391
      %v2544 = vmul.f32 %v2394, %v2394
      %v2545 = vmul.f32 %v2399, %v2399
      %v2546 = vmul.f32 %v2402, %v2402
      %v2547 = vmul.f32 %v2407, %v2407
      %v2548 = vmul.f32 %v2410, %v2410
      %v2549 = vmul.f32 %v2415, %v2415
      %v2550 = vmul.f32 %v2418, %v2418
      %v2551 = vmul.f32 %v2423, %v2423
      %v2552 = vmul.f32 %v2426, %v2426
      %v2553 = vmul.f32 %v2431, %v2431
      %v2554 = vmul.f32 %v2434, %v2434
      %v2555 = vmul.f32 %v2439, %v2439
      %v2556 = vmul.f32 %v2442, %v2442
      %v2557 = vmul.f32 %v2447, %v2447
      %v2558 = vmul.f32 %v2450, %v2450
      %v2559 = vadd.f32 %v2527, %v2528
      %v2560 = vadd.f32 %v2559, %v2529
      %v2561 = vadd.f32 %v2560, %v2530
      %v2562 = vadd.f32 %v2561, %v2531
      %v2563 = vadd.f32 %v2562, %v2532
      %v2564 = vadd.f32 %v2563, %v2533
      %v2565 = vadd.f32 %v2564, %v2534
      %v2566 = vadd.f32 %v2565, %v2535
      %v2567 = vadd.f32 %v2566, %v2536
      %v2568 = vadd.f32 %v2567, %v2537
      %v2569 = vadd.f32 %v2568, %v2538
      %v2570 = vadd.f32 %v2569, %v2539
      %v2571 = vadd.f32 %v2570, %v2540
      %v2572 = vadd.f32 %v2571, %v2541
      %v2573 = vadd.f32 %v2572, %v2542
      %v2574 = vadd.f32 %v2573, %v2543
      %v2575 = vadd.f32 %v2574, %v2544
      %v2576 = vadd.f32 %v2575, %v2545
      %v2577 = vadd.f32 %v2576, %v2546
      %v2578 = vadd.f32 %v2577, %v2547
      %v2579 = vadd.f32 %v2578, %v2548
      %v2580 = vadd.f32 %v2579, %v2549
      %v2581 = vadd.f32 %v2580, %v2550
      %v2582 = vadd.f32 %v2581, %v2551
      %v2583 = vadd.f32 %v2582, %v2552
      %v2584 = vadd.f32 %v2583, %v2553
      %v2585 = vadd.f32 %v2584, %v2554
      %v2586 = vadd.f32 %v2585, %v2555
      %v2587 = vadd.f32 %v2586, %v2556
      %v2588 = vadd.f32 %v2587, %v2557
      %v2589 = vadd.f32 %v2588, %v2558
      %v2590 = vrot.slane %v2589, 4
      %v2591 = vadd.f32 %v2589, %v2590
      %v2592 = vrot.slane %v2591, 2
      %v2593 = vadd.f32 %v2591, %v2592
      %v2594 = vrot.slane %v2593, 1
      %v2595 = vadd.f32 %v2593, %v2594
      %v2596 = vld [vmem:[%s3] sm:$0x3]
      %vm2597 = vcmask 1040384
      %v2598 = vsel %vm2597, %v2526, %v2595
      %v2599 = vadd.f32 %v2596, %v2598
      %2600 = vst [vmem:[%s3] sm:$0x3] %v2599
      %s2601 = smul.u32 32, %s15
      %p2602 = scmp.lt.s32.totalorder %s2601, 127
      %s2603 = scalar_select %p2602, %s2601, 127
      %s2604 = smul.addr %s2603, 8
      %s2605 = scalar_lea.vmem %s2, %s2604
      // Predicated region
      $region33: #{c5_head_forward.2} parent=27 // pred_check
        %p2606 = pneg %p80
      $region34: #{c5_head_forward.2} parent=27 // pred_check_branch
        %2608 = sbr.rel (%p2606) target = $region36
      $region35: #{c5_head_forward.2} parent=27 // pred_region
        %s2609 = smul.u32 32, %s15
      $region36: #{c5_head_forward.2} parent=27 // pred_fallthru
        _
      // Predicated region
      $region37: #{c5_head_forward.2} parent=27 // pred_check
        %p2610 = pneg %p101
      $region38: #{c5_head_forward.2} parent=27 // pred_check_branch
        %2612 = sbr.rel (%p2610) target = $region40
      $region39: #{c5_head_forward.2} parent=27 // pred_region
        _
      $region40: #{c5_head_forward.2} parent=27 // pred_fallthru
        _
      // Predicated region
      $region41: #{c5_head_forward.2} parent=27 // pred_check
        %p2613 = pneg %p101
      $region42: #{c5_head_forward.2} parent=27 // pred_check_branch
        %2615 = sbr.rel (%p2613) target = $region44
      $region43: #{c5_head_forward.2} parent=27 // pred_region
        _
      $region44: #{c5_head_forward.2} parent=27 // pred_fallthru
        _
    $region28: #{c5_head_forward.2} parent=5 // pred_fallthru
      _
    %p2616 = scmp.le.s32.totalorder 2, %s10
    // Predicated region
    $region45: #{c5_head_forward.2} parent=5 // pred_check
      %p2617 = pneg %p2616
    $region46: #{c5_head_forward.2} parent=5 // pred_check_branch
      %2619 = sbr.rel (%p2617) target = $region48
    $region47: #{c5_head_forward.2} parent=5 // pred_region
      %s2620 = ssub.s32 %s10, 2
      // Predicated region
      $region49: #{c5_head_forward.2} parent=47 // pred_check
        %p2621 = pneg %p86
      $region50: #{c5_head_forward.2} parent=47 // pred_check_branch
        %2623 = sbr.rel (%p2621) target = $region52
      $region51: #{c5_head_forward.2} parent=47 // pred_region
        %s2624 = smul.u32 32, %s16
        %p2625 = scmp.lt.s32.totalorder %s2624, 127
        %s2626 = scalar_select %p2625, %s2624, 127
        %s2627 = smul.addr %s2626, 8
        %s2628 = scalar_lea.vmem %s2, %s2627
      $region52: #{c5_head_forward.2} parent=47 // pred_fallthru
        _
    $region48: #{c5_head_forward.2} parent=5 // pred_fallthru
      _
  $region6: #{c5_head_forward.2} parent=0 // loop_footer
    %s14 = sadd.s32 1, %s10
  $region7: #{c5_head_forward.2} parent=0 // loop_footer_branch
    %9 = sbr.rel target = $region3
  $region8: #{c5_head_forward.2} parent=0 // loop_exit
    _

// kernel: c5_head_forward.3
$region0: #{c5_head_forward.3}
  #allocation0 [shape = 'u32[]', space=smem, size = 0x4, offset = 0x4, fixed_abs, tag = 'smem constant byte address 0x4 - core index']
  #allocation1 [shape = 'u32[144,128]{1,0:T(1,128)}', space=vmem, size = 0x12000, scoped, tag = 'internal scratch']
  %s0 = inlined_call_operand.vmem [shape: f32[1024,128], index: 0, kind: input, shape index: {}]
  %s1 = inlined_call_operand.vmem [shape: f32[2,128], index: 1, kind: input, shape index: {}]
  %s2 = inlined_call_operand.vmem [shape: f32[1,128], index: 2, kind: input, shape index: {}]
  %s3 = inlined_call_operand.vmem [shape: f32[1,128], index: 3, kind: input, shape index: {}]
  %s4 = inlined_call_operand.vmem [shape: bf16[128,128], index: 4, kind: input, shape index: {}]
  %s5 = inlined_call_operand.vmem [shape: f32[1024,128], index: 5, kind: output, shape index: {}]
  %s6 = sld [smem:[#allocation0]]
  $region53: #{c5_head_forward.3} parent=0
    _
  %s8 = ssub.s32 1, %s6
  %s9 = scalar_select 0, %s8, %s6
  loop: start=0, step=1, limit=6
  $region2: #{c5_head_forward.3} parent=0 // loop_pre_header
    _
  $region3: #{c5_head_forward.3} parent=0 // loop_header
    %s11 = sphi 0, %s15
    %p12 = scmp.ge.s32.totalorder %s11, 6
    %s21 = sphi 0, %s23
    %s24 = sphi 0, %s21
    %s25 = sphi 0, %s24
    %s41 = sphi 0, %s25
    %s45 = sphi 0, %s45
    %s47 = sphi 0, %s45
    %s48 = sphi 0, %s47
    %s62 = sphi 0, %s48
    %s66 = sphi 0, %s66
    %s68 = sphi 0, %s66
    %s69 = sphi 0, %s68
    %s83 = sphi 0, %s69
    %s87 = sphi 0, %s87
    %s89 = sphi 0, %s87
    %s90 = sphi 0, %s89
    %s104 = sphi 0, %s90
    %s108 = sphi 0, %s108
    %s110 = sphi 0, %s108
    %s111 = sphi 0, %s110
    %s125 = sphi 0, %s111
    %s131 = sphi 0, %s133
    %s134 = sphi 0, %s131
    %s135 = sphi 0, %s134
    %s151 = sphi 0, %s135
  $region4: #{c5_head_forward.3} parent=0 // loop_header_branch
    %14 = sbr.rel (%p12) target = $region8
  $region5: #{c5_head_forward.3} parent=0 // loop_body
    %s16 = ssub.s32 %s11, 1
    %s17 = ssub.s32 %s11, 2
    %s18 = sadd.s32 %s11, 1
    %s19 = ssub.s32 %s11, %s18
    %p20 = scmp.eq.s32.totalorder %s19, 0
    %s22 = sadd.s32 %s21, 1
    %s23 = scalar_select %p20, %s21, %s22
    %p26 = pneg %p20
    %p27 = scmp.eq.s32.totalorder %s11, 3
    %p28 = por %p26, %p27
    %p29 = scmp.ne.s32.totalorder %s21, %s24
    %p30 = scmp.eq.s32.totalorder %s11, 0
    %p31 = por %p29, %p30
    %p32 = scmp.ne.s32.totalorder %s21, %s24
    %p33 = scmp.eq.s32.totalorder %s16, 3
    %p34 = por %p32, %p33
    %p35 = scmp.ne.s32.totalorder %s24, %s25
    %p36 = scmp.eq.s32.totalorder %s16, 0
    %p37 = por %p35, %p36
    %p38 = scmp.ne.s32.totalorder %s24, %s25
    %p39 = scmp.eq.s32.totalorder %s17, 3
    %p40 = por %p38, %p39
    %p42 = scmp.ne.s32.totalorder %s25, %s41
    %p43 = scmp.eq.s32.totalorder %s17, 0
    %p44 = por %p42, %p43
    %s46 = sadd.s32 %s45, 1
    %p49 = scmp.eq.s32.totalorder %s11, 3
    %p50 = scmp.ne.s32.totalorder %s45, %s47
    %p51 = scmp.eq.s32.totalorder %s11, 0
    %p52 = por %p50, %p51
    %p53 = scmp.ne.s32.totalorder %s45, %s47
    %p54 = scmp.eq.s32.totalorder %s16, 3
    %p55 = por %p53, %p54
    %p56 = scmp.ne.s32.totalorder %s47, %s48
    %p57 = scmp.eq.s32.totalorder %s16, 0
    %p58 = por %p56, %p57
    %p59 = scmp.ne.s32.totalorder %s47, %s48
    %p60 = scmp.eq.s32.totalorder %s17, 3
    %p61 = por %p59, %p60
    %p63 = scmp.ne.s32.totalorder %s48, %s62
    %p64 = scmp.eq.s32.totalorder %s17, 0
    %p65 = por %p63, %p64
    %s67 = sadd.s32 %s66, 1
    %p70 = scmp.eq.s32.totalorder %s11, 3
    %p71 = scmp.ne.s32.totalorder %s66, %s68
    %p72 = scmp.eq.s32.totalorder %s11, 0
    %p73 = por %p71, %p72
    %p74 = scmp.ne.s32.totalorder %s66, %s68
    %p75 = scmp.eq.s32.totalorder %s16, 3
    %p76 = por %p74, %p75
    %p77 = scmp.ne.s32.totalorder %s68, %s69
    %p78 = scmp.eq.s32.totalorder %s16, 0
    %p79 = por %p77, %p78
    %p80 = scmp.ne.s32.totalorder %s68, %s69
    %p81 = scmp.eq.s32.totalorder %s17, 3
    %p82 = por %p80, %p81
    %p84 = scmp.ne.s32.totalorder %s69, %s83
    %p85 = scmp.eq.s32.totalorder %s17, 0
    %p86 = por %p84, %p85
    %s88 = sadd.s32 %s87, 1
    %p91 = scmp.eq.s32.totalorder %s11, 3
    %p92 = scmp.ne.s32.totalorder %s87, %s89
    %p93 = scmp.eq.s32.totalorder %s11, 0
    %p94 = por %p92, %p93
    %p95 = scmp.ne.s32.totalorder %s87, %s89
    %p96 = scmp.eq.s32.totalorder %s16, 3
    %p97 = por %p95, %p96
    %p98 = scmp.ne.s32.totalorder %s89, %s90
    %p99 = scmp.eq.s32.totalorder %s16, 0
    %p100 = por %p98, %p99
    %p101 = scmp.ne.s32.totalorder %s89, %s90
    %p102 = scmp.eq.s32.totalorder %s17, 3
    %p103 = por %p101, %p102
    %p105 = scmp.ne.s32.totalorder %s90, %s104
    %p106 = scmp.eq.s32.totalorder %s17, 0
    %p107 = por %p105, %p106
    %s109 = sadd.s32 %s108, 1
    %p112 = scmp.eq.s32.totalorder %s11, 3
    %p113 = scmp.ne.s32.totalorder %s108, %s110
    %p114 = scmp.eq.s32.totalorder %s11, 0
    %p115 = por %p113, %p114
    %p116 = scmp.ne.s32.totalorder %s108, %s110
    %p117 = scmp.eq.s32.totalorder %s16, 3
    %p118 = por %p116, %p117
    %p119 = scmp.ne.s32.totalorder %s110, %s111
    %p120 = scmp.eq.s32.totalorder %s16, 0
    %p121 = por %p119, %p120
    %p122 = scmp.ne.s32.totalorder %s110, %s111
    %p123 = scmp.eq.s32.totalorder %s17, 3
    %p124 = por %p122, %p123
    %p126 = scmp.ne.s32.totalorder %s111, %s125
    %p127 = scmp.eq.s32.totalorder %s17, 0
    %p128 = por %p126, %p127
    %s129 = ssub.s32 %s11, %s18
    %p130 = scmp.eq.s32.totalorder %s129, 0
    %s132 = sadd.s32 %s131, 1
    %s133 = scalar_select %p130, %s131, %s132
    %p136 = pneg %p130
    %p137 = scmp.eq.s32.totalorder %s11, 3
    %p138 = por %p136, %p137
    %p139 = scmp.ne.s32.totalorder %s131, %s134
    %p140 = scmp.eq.s32.totalorder %s11, 0
    %p141 = por %p139, %p140
    %p142 = scmp.ne.s32.totalorder %s131, %s134
    %p143 = scmp.eq.s32.totalorder %s16, 3
    %p144 = por %p142, %p143
    %p145 = scmp.ne.s32.totalorder %s134, %s135
    %p146 = scmp.eq.s32.totalorder %s16, 0
    %p147 = por %p145, %p146
    %p148 = scmp.ne.s32.totalorder %s134, %s135
    %p149 = scmp.eq.s32.totalorder %s17, 3
    %p150 = por %p148, %p149
    %p152 = scmp.ne.s32.totalorder %s135, %s151
    %p153 = scmp.eq.s32.totalorder %s17, 0
    %p154 = por %p152, %p153
    %p155 = scmp.le.s32.totalorder 1, %s11
    %p156 = scmp.lt.s32.totalorder %s11, 5
    %p157 = pnand %p155, %p156
    %p158 = pneg %p157
    // Predicated region
    $region9: #{c5_head_forward.3} parent=5 // pred_check
      _
    $region10: #{c5_head_forward.3} parent=5 // pred_check_branch
      %160 = sbr.rel (%p157) target = $region12
    $region11: #{c5_head_forward.3} parent=5 // pred_region
      %s161 = ssub.s32 %s11, 1
      // Predicated region
      $region13: #{c5_head_forward.3} parent=11 // pred_check
        %p162 = pneg %p58
      $region14: #{c5_head_forward.3} parent=11 // pred_check_branch
        %164 = sbr.rel (%p162) target = $region16
      $region15: #{c5_head_forward.3} parent=11 // pred_region
        _
      $region16: #{c5_head_forward.3} parent=11 // pred_fallthru
        _
      // Predicated region
      $region17: #{c5_head_forward.3} parent=11 // pred_check
        %p165 = pneg %p79
      $region18: #{c5_head_forward.3} parent=11 // pred_check_branch
        %167 = sbr.rel (%p165) target = $region20
      $region19: #{c5_head_forward.3} parent=11 // pred_region
        _
      $region20: #{c5_head_forward.3} parent=11 // pred_fallthru
        _
      // Predicated region
      $region21: #{c5_head_forward.3} parent=11 // pred_check
        %p168 = pneg %p100
      $region22: #{c5_head_forward.3} parent=11 // pred_check_branch
        %170 = sbr.rel (%p168) target = $region24
      $region23: #{c5_head_forward.3} parent=11 // pred_region
        _
      $region24: #{c5_head_forward.3} parent=11 // pred_fallthru
        _
      // Predicated region
      $region25: #{c5_head_forward.3} parent=11 // pred_check
        %p171 = pneg %p121
      $region26: #{c5_head_forward.3} parent=11 // pred_check_branch
        %173 = sbr.rel (%p171) target = $region28
      $region27: #{c5_head_forward.3} parent=11 // pred_region
        _
      $region28: #{c5_head_forward.3} parent=11 // pred_fallthru
        _
    $region12: #{c5_head_forward.3} parent=5 // pred_fallthru
      _
    %p174 = scmp.lt.s32.totalorder %s11, 4
    // Predicated region
    $region29: #{c5_head_forward.3} parent=5 // pred_check
      %p175 = pneg %p174
    $region30: #{c5_head_forward.3} parent=5 // pred_check_branch
      %177 = sbr.rel (%p175) target = $region32
    $region31: #{c5_head_forward.3} parent=5 // pred_region
      // Predicated region
      $region33: #{c5_head_forward.3} parent=31 // pred_check
        %p178 = pneg %p31
      $region34: #{c5_head_forward.3} parent=31 // pred_check_branch
        %180 = sbr.rel (%p178) target = $region36
      $region35: #{c5_head_forward.3} parent=31 // pred_region
        %s181 = smul.u32 32, %s11
        %p182 = scmp.lt.s32.totalorder %s181, 127
        %s183 = scalar_select %p182, %s181, 127
        %s184 = smul.addr %s183, 8
        %s185 = scalar_lea.vmem %s0, %s184
        %s186 = smul.u32 32, %s11
      $region36: #{c5_head_forward.3} parent=31 // pred_fallthru
        _
    $region32: #{c5_head_forward.3} parent=5 // pred_fallthru
      _
    %p187 = scmp.le.s32.totalorder 1, %s11
    %p188 = scmp.lt.s32.totalorder %s11, 5
    %p189 = pnand %p187, %p188
    %p190 = pneg %p189
    // Predicated region
    $region37: #{c5_head_forward.3} parent=5 // pred_check
      _
    $region38: #{c5_head_forward.3} parent=5 // pred_check_branch
      %192 = sbr.rel (%p189) target = $region40
    $region39: #{c5_head_forward.3} parent=5 // pred_region
      %s193 = ssub.s32 %s11, 1
      %s194 = smul.u32 32, %s16
      %p195 = scmp.lt.s32.totalorder %s194, 127
      %s196 = scalar_select %p195, %s194, 127
      %s197 = smul.addr %s196, 8
      %s198 = scalar_lea.vmem %s0, %s197
      %p199 = pneg %p37
      %p200 = pneg %p34
      %p201 = pneg %p58
      %p202 = pneg %p55
      %p203 = pneg %p79
      %p204 = pneg %p76
      %p205 = pneg %p100
      %p206 = pneg %p97
      %p207 = pneg %p121
      %p208 = pneg %p118
      %p209 = pneg %p147
      %p210 = pneg %p144
      %s211 = smul.u32 32, %s16
      %p212 = scmp.lt.s32.totalorder %s211, 127
      %s213 = scalar_select %p212, %s211, 127
      %s214 = smul.addr %s213, 8
      %s215 = scalar_lea.vmem %s5, %s214
      %s216 = smul.u32 32, %s16
      %p217 = scmp.lt.s32.totalorder %s216, 127
      %s218 = scalar_select %p217, %s216, 127
      %s219 = smul.addr %s218, 8
      %s220 = scalar_lea.vmem %s0, %s219
      %s221 = smul.u32 32, %s16
      %s222 = smul.u32 32, %s16
      %p223 = scmp.lt.s32.totalorder %s222, 127
      %s224 = scalar_select %p223, %s222, 127
      %s225 = smul.addr %s224, 8
      %s226 = scalar_lea.vmem %s5, %s225
      %s227 = smul.u32 32, %s16
      %v229 = vld [vmem:[%s1] sm:$0x1]
      %v230 = vmul.f32 %v229, 0.0009765625
      %v231 = vld [vmem:[%s1 + $0x1] sm:$0x1]
      %v232 = vmul.f32 %v231, 0.0009765625
      %v233 = vmul.f32 %v230, %v230
      %v234 = vsub.f32 %v232, %v233
      %v235 = vld [vmem:[%s2] sm:$0x1]
      %v236 = vadd.f32 %v234, 1e-05
      %v237 = vrsqrt.pop %v236
      %v238 = vmul.f32 %v235, %v237
      %v239 = vld [vmem:[%s3] sm:$0x1]
      %v240 = vmul.f32 %v230, %v238
      %v241 = vsub.f32 %v239, %v240
      %v242 = vld [vmem:[%s220] sm:$0xff]
      %v243 = vld [vmem:[%s220 + $0x8] sm:$0xff]
      %v244 = vld [vmem:[%s220 + $0x10] sm:$0xff]
      %v245 = vld [vmem:[%s220 + $0x18] sm:$0xff]
      %v246 = vld [vmem:[%s220 + $0x20] sm:$0xff]
      %v247 = vld [vmem:[%s220 + $0x28] sm:$0xff]
      %v248 = vld [vmem:[%s220 + $0x30] sm:$0xff]
      %v249 = vld [vmem:[%s220 + $0x38] sm:$0xff]
      %v250 = vld [vmem:[%s220 + $0x40] sm:$0xff]
      %v251 = vld [vmem:[%s220 + $0x48] sm:$0xff]
      %v252 = vld [vmem:[%s220 + $0x50] sm:$0xff]
      %v253 = vld [vmem:[%s220 + $0x58] sm:$0xff]
      %v254 = vld [vmem:[%s220 + $0x60] sm:$0xff]
      %v255 = vld [vmem:[%s220 + $0x68] sm:$0xff]
      %v256 = vld [vmem:[%s220 + $0x70] sm:$0xff]
      %v257 = vld [vmem:[%s220 + $0x78] sm:$0xff]
      %v258 = vld [vmem:[%s220 + $0x80] sm:$0xff]
      %v259 = vld [vmem:[%s220 + $0x88] sm:$0xff]
      %v260 = vld [vmem:[%s220 + $0x90] sm:$0xff]
      %v261 = vld [vmem:[%s220 + $0x98] sm:$0xff]
      %v262 = vld [vmem:[%s220 + $0xa0] sm:$0xff]
      %v263 = vld [vmem:[%s220 + $0xa8] sm:$0xff]
      %v264 = vld [vmem:[%s220 + $0xb0] sm:$0xff]
      %v265 = vld [vmem:[%s220 + $0xb8] sm:$0xff]
      %v266 = vld [vmem:[%s220 + $0xc0] sm:$0xff]
      %v267 = vld [vmem:[%s220 + $0xc8] sm:$0xff]
      %v268 = vld [vmem:[%s220 + $0xd0] sm:$0xff]
      %v269 = vld [vmem:[%s220 + $0xd8] sm:$0xff]
      %v270 = vld [vmem:[%s220 + $0xe0] sm:$0xff]
      %v271 = vld [vmem:[%s220 + $0xe8] sm:$0xff]
      %v272 = vld [vmem:[%s220 + $0xf0] sm:$0xff]
      %v273 = vld [vmem:[%s220 + $0xf8] sm:$0xff]
      %v275 = vlaneseq
      %v276 = vshrl.u32 %v275, 7
      %v277 = vsub.s32 0, %v276
      %v278 = vrot.slane %v238, %v277
      %v280 = vmul.f32 %v242, %v278
      %v281 = vmul.f32 %v243, %v278
      %v282 = vmul.f32 %v244, %v278
      %v283 = vmul.f32 %v245, %v278
      %v284 = vmul.f32 %v246, %v278
      %v285 = vmul.f32 %v247, %v278
      %v286 = vmul.f32 %v248, %v278
      %v287 = vmul.f32 %v249, %v278
      %v288 = vmul.f32 %v250, %v278
      %v289 = vmul.f32 %v251, %v278
      %v290 = vmul.f32 %v252, %v278
      %v291 = vmul.f32 %v253, %v278
      %v292 = vmul.f32 %v254, %v278
      %v293 = vmul.f32 %v255, %v278
      %v294 = vmul.f32 %v256, %v278
      %v295 = vmul.f32 %v257, %v278
      %v296 = vmul.f32 %v258, %v278
      %v297 = vmul.f32 %v259, %v278
      %v298 = vmul.f32 %v260, %v278
      %v299 = vmul.f32 %v261, %v278
      %v300 = vmul.f32 %v262, %v278
      %v301 = vmul.f32 %v263, %v278
      %v302 = vmul.f32 %v264, %v278
      %v303 = vmul.f32 %v265, %v278
      %v304 = vmul.f32 %v266, %v278
      %v305 = vmul.f32 %v267, %v278
      %v306 = vmul.f32 %v268, %v278
      %v307 = vmul.f32 %v269, %v278
      %v308 = vmul.f32 %v270, %v278
      %v309 = vmul.f32 %v271, %v278
      %v310 = vmul.f32 %v272, %v278
      %v311 = vmul.f32 %v273, %v278
      %v313 = vlaneseq
      %v314 = vshrl.u32 %v313, 7
      %v315 = vsub.s32 0, %v314
      %v316 = vrot.slane %v241, %v315
      %v318 = vadd.f32 %v280, %v316
      %v319 = vadd.f32 %v281, %v316
      %v320 = vadd.f32 %v282, %v316
      %v321 = vadd.f32 %v283, %v316
      %v322 = vadd.f32 %v284, %v316
      %v323 = vadd.f32 %v285, %v316
      %v324 = vadd.f32 %v286, %v316
      %v325 = vadd.f32 %v287, %v316
      %v326 = vadd.f32 %v288, %v316
      %v327 = vadd.f32 %v289, %v316
      %v328 = vadd.f32 %v290, %v316
      %v329 = vadd.f32 %v291, %v316
      %v330 = vadd.f32 %v292, %v316
      %v331 = vadd.f32 %v293, %v316
      %v332 = vadd.f32 %v294, %v316
      %v333 = vadd.f32 %v295, %v316
      %v334 = vadd.f32 %v296, %v316
      %v335 = vadd.f32 %v297, %v316
      %v336 = vadd.f32 %v298, %v316
      %v337 = vadd.f32 %v299, %v316
      %v338 = vadd.f32 %v300, %v316
      %v339 = vadd.f32 %v301, %v316
      %v340 = vadd.f32 %v302, %v316
      %v341 = vadd.f32 %v303, %v316
      %v342 = vadd.f32 %v304, %v316
      %v343 = vadd.f32 %v305, %v316
      %v344 = vadd.f32 %v306, %v316
      %v345 = vadd.f32 %v307, %v316
      %v346 = vadd.f32 %v308, %v316
      %v347 = vadd.f32 %v309, %v316
      %v348 = vadd.f32 %v310, %v316
      %v349 = vadd.f32 %v311, %v316
      %v350 = vmax.f32 %v318, 0.0
      %v351 = vmax.f32 %v319, 0.0
      %v352 = vmax.f32 %v320, 0.0
      %v353 = vmax.f32 %v321, 0.0
      %v354 = vmax.f32 %v322, 0.0
      %v355 = vmax.f32 %v323, 0.0
      %v356 = vmax.f32 %v324, 0.0
      %v357 = vmax.f32 %v325, 0.0
      %v358 = vmax.f32 %v326, 0.0
      %v359 = vmax.f32 %v327, 0.0
      %v360 = vmax.f32 %v328, 0.0
      %v361 = vmax.f32 %v329, 0.0
      %v362 = vmax.f32 %v330, 0.0
      %v363 = vmax.f32 %v331, 0.0
      %v364 = vmax.f32 %v332, 0.0
      %v365 = vmax.f32 %v333, 0.0
      %v366 = vmax.f32 %v334, 0.0
      %v367 = vmax.f32 %v335, 0.0
      %v368 = vmax.f32 %v336, 0.0
      %v369 = vmax.f32 %v337, 0.0
      %v370 = vmax.f32 %v338, 0.0
      %v371 = vmax.f32 %v339, 0.0
      %v372 = vmax.f32 %v340, 0.0
      %v373 = vmax.f32 %v341, 0.0
      %v374 = vmax.f32 %v342, 0.0
      %v375 = vmax.f32 %v343, 0.0
      %v376 = vmax.f32 %v344, 0.0
      %v377 = vmax.f32 %v345, 0.0
      %v378 = vmax.f32 %v346, 0.0
      %v379 = vmax.f32 %v347, 0.0
      %v380 = vmax.f32 %v348, 0.0
      %v381 = vmax.f32 %v349, 0.0
      %v382 = vpack.c.bf16 %v351, %v350
      %v383 = vpack.c.bf16 %v353, %v352
      %v384 = vpack.c.bf16 %v355, %v354
      %v385 = vpack.c.bf16 %v357, %v356
      %v386 = vpack.c.bf16 %v359, %v358
      %v387 = vpack.c.bf16 %v361, %v360
      %v388 = vpack.c.bf16 %v363, %v362
      %v389 = vpack.c.bf16 %v365, %v364
      %v390 = vpack.c.bf16 %v367, %v366
      %v391 = vpack.c.bf16 %v369, %v368
      %v392 = vpack.c.bf16 %v371, %v370
      %v393 = vpack.c.bf16 %v373, %v372
      %v394 = vpack.c.bf16 %v375, %v374
      %v395 = vpack.c.bf16 %v377, %v376
      %v396 = vpack.c.bf16 %v379, %v378
      %v397 = vpack.c.bf16 %v381, %v380
      %v398 = vld [vmem:[%s4] sm:$0xf]
      %v399 = vld [vmem:[%s4 + $0x4] sm:$0xf]
      %v400 = vld [vmem:[%s4 + $0x8] sm:$0xf]
      %v401 = vld [vmem:[%s4 + $0xc] sm:$0xf]
      %v402 = vld [vmem:[%s4 + $0x10] sm:$0xf]
      %v403 = vld [vmem:[%s4 + $0x14] sm:$0xf]
      %v404 = vld [vmem:[%s4 + $0x18] sm:$0xf]
      %v405 = vld [vmem:[%s4 + $0x1c] sm:$0xf]
      %v406 = vld [vmem:[%s4 + $0x20] sm:$0xf]
      %v407 = vld [vmem:[%s4 + $0x24] sm:$0xf]
      %v408 = vld [vmem:[%s4 + $0x28] sm:$0xf]
      %v409 = vld [vmem:[%s4 + $0x2c] sm:$0xf]
      %v410 = vld [vmem:[%s4 + $0x30] sm:$0xf]
      %v411 = vld [vmem:[%s4 + $0x34] sm:$0xf]
      %v412 = vld [vmem:[%s4 + $0x38] sm:$0xf]
      %v413 = vld [vmem:[%s4 + $0x3c] sm:$0xf]
      %v430 = vunpack.c.l.b16 %v398
      %v431 = vunpack.c.l.b16 %v399
      %v432 = vunpack.c.l.b16 %v400
      %v433 = vunpack.c.l.b16 %v401
      %v434 = vunpack.c.l.b16 %v402
      %v435 = vunpack.c.l.b16 %v403
      %v436 = vunpack.c.l.b16 %v404
      %v437 = vunpack.c.l.b16 %v405
      %v438 = vunpack.c.l.b16 %v406
      %v439 = vunpack.c.l.b16 %v407
      %v440 = vunpack.c.l.b16 %v408
      %v441 = vunpack.c.l.b16 %v409
      %v442 = vunpack.c.l.b16 %v410
      %v443 = vunpack.c.l.b16 %v411
      %v444 = vunpack.c.l.b16 %v412
      %v445 = vunpack.c.l.b16 %v413
      %v446 = vpack.c.b16 %v431, %v430
      %v447 = vpack.c.b16 %v433, %v432
      %v448 = vpack.c.b16 %v435, %v434
      %v449 = vpack.c.b16 %v437, %v436
      %v450 = vpack.c.b16 %v439, %v438
      %v451 = vpack.c.b16 %v441, %v440
      %v452 = vpack.c.b16 %v443, %v442
      %v453 = vpack.c.b16 %v445, %v444
      %462 = vmatprep.subr.bf16.mxu0 0
      %463 = vmatpush1.bf16.msra.mxu0 %v446
      %464 = vmatprep.subr.bf16.mxu0 0
      %465 = vmatpush1.bf16.msra.mxu0 %v447
      %466 = vmatprep.subr.bf16.mxu0 0
      %467 = vmatpush1.bf16.msra.mxu0 %v448
      %468 = vmatprep.subr.bf16.mxu0 0
      %469 = vmatpush1.bf16.msra.mxu0 %v449
      %470 = vmatprep.subr.bf16.mxu0 0
      %471 = vmatpush1.bf16.msra.mxu0 %v450
      %472 = vmatprep.subr.bf16.mxu0 0
      %473 = vmatpush1.bf16.msra.mxu0 %v451
      %474 = vmatprep.subr.bf16.mxu0 0
      %475 = vmatpush1.bf16.msra.mxu0 %v452
      %476 = vmatprep.subr.bf16.mxu0 0
      %477 = vmatpush1.bf16.msra.mxu0 %v453
      %478 = vmatprep.subr.bf16.mxu0 0
      %479 = vmatpush1.bf16.msra.mxu0 0
      %480 = vmatprep.subr.bf16.mxu0 0
      %481 = vmatpush1.bf16.msra.mxu0 0
      %482 = vmatprep.subr.bf16.mxu0 0
      %483 = vmatpush1.bf16.msra.mxu0 0
      %484 = vmatprep.subr.bf16.mxu0 0
      %485 = vmatpush1.bf16.msra.mxu0 0
      %486 = vmatprep.subr.bf16.mxu0 0
      %487 = vmatpush1.bf16.msra.mxu0 0
      %488 = vmatprep.subr.bf16.mxu0 0
      %489 = vmatpush1.bf16.msra.mxu0 0
      %490 = vmatprep.subr.bf16.mxu0 0
      %491 = vmatpush1.bf16.msra.mxu0 0
      %492 = vmatprep.subr.bf16.mxu0 0
      %493 = vmatpush1.bf16.msra.mxu0 0
      %494 = vmatprep.mubr.bf16.mxu0 0
      %495 = vmatmul.mubr.bf16.gmra.mrb[0].mxu0 %v382
      %v496 = vpop.f32.mrb[0].mxu0
      %v497 = vadd.f32 0.0, %v496
      %v498 = vpop.f32.mrb[0].mxu0
      %v499 = vpop.f32.mrb[0].mxu0
      %v500 = vadd.f32 0.0, %v499
      %v501 = vpop.f32.mrb[0].mxu0
      %502 = vmatprep.mubr.bf16.mxu0 0
      %503 = vmatmul.mubr.bf16.gmra.mrb[0].mxu0 %v383
      %v504 = vpop.f32.mrb[0].mxu0
      %v505 = vadd.f32 0.0, %v504
      %v506 = vpop.f32.mrb[0].mxu0
      %v507 = vpop.f32.mrb[0].mxu0
      %v508 = vadd.f32 0.0, %v507
      %v509 = vpop.f32.mrb[0].mxu0
      %510 = vmatprep.mubr.bf16.mxu0 0
      %511 = vmatmul.mubr.bf16.gmra.mrb[0].mxu0 %v384
      %v512 = vpop.f32.mrb[0].mxu0
      %v513 = vadd.f32 0.0, %v512
      %v514 = vpop.f32.mrb[0].mxu0
      %v515 = vpop.f32.mrb[0].mxu0
      %v516 = vadd.f32 0.0, %v515
      %v517 = vpop.f32.mrb[0].mxu0
      %518 = vmatprep.mubr.bf16.mxu0 0
      %519 = vmatmul.mubr.bf16.gmra.mrb[0].mxu0 %v385
      %v520 = vpop.f32.mrb[0].mxu0
      %v521 = vadd.f32 0.0, %v520
      %v522 = vpop.f32.mrb[0].mxu0
      %v523 = vpop.f32.mrb[0].mxu0
      %v524 = vadd.f32 0.0, %v523
      %v525 = vpop.f32.mrb[0].mxu0
      %526 = vmatprep.mubr.bf16.mxu0 0
      %527 = vmatmul.mubr.bf16.gmra.mrb[0].mxu0 %v386
      %v528 = vpop.f32.mrb[0].mxu0
      %v529 = vadd.f32 0.0, %v528
      %v530 = vpop.f32.mrb[0].mxu0
      %v531 = vpop.f32.mrb[0].mxu0
      %v532 = vadd.f32 0.0, %v531
      %v533 = vpop.f32.mrb[0].mxu0
      %534 = vmatprep.mubr.bf16.mxu0 0
      %535 = vmatmul.mubr.bf16.gmra.mrb[0].mxu0 %v387
      %v536 = vpop.f32.mrb[0].mxu0
      %v537 = vadd.f32 0.0, %v536
      %v538 = vpop.f32.mrb[0].mxu0
      %v539 = vpop.f32.mrb[0].mxu0
      %v540 = vadd.f32 0.0, %v539
      %v541 = vpop.f32.mrb[0].mxu0
      %542 = vmatprep.mubr.bf16.mxu0 0
      %543 = vmatmul.mubr.bf16.gmra.mrb[0].mxu0 %v388
      %v544 = vpop.f32.mrb[0].mxu0
      %v545 = vadd.f32 0.0, %v544
      %v546 = vpop.f32.mrb[0].mxu0
      %v547 = vpop.f32.mrb[0].mxu0
      %v548 = vadd.f32 0.0, %v547
      %v549 = vpop.f32.mrb[0].mxu0
      %550 = vmatprep.mubr.bf16.mxu0 0
      %551 = vmatmul.mubr.bf16.gmra.mrb[0].mxu0 %v389
      %v552 = vpop.f32.mrb[0].mxu0
      %v553 = vadd.f32 0.0, %v552
      %v554 = vpop.f32.mrb[0].mxu0
      %v555 = vpop.f32.mrb[0].mxu0
      %v556 = vadd.f32 0.0, %v555
      %v557 = vpop.f32.mrb[0].mxu0
      %558 = vmatprep.mubr.bf16.mxu0 0
      %559 = vmatmul.mubr.bf16.gmra.mrb[0].mxu0 %v390
      %v560 = vpop.f32.mrb[0].mxu0
      %v561 = vadd.f32 0.0, %v560
      %v562 = vpop.f32.mrb[0].mxu0
      %v563 = vpop.f32.mrb[0].mxu0
      %v564 = vadd.f32 0.0, %v563
      %v565 = vpop.f32.mrb[0].mxu0
      %566 = vmatprep.mubr.bf16.mxu0 0
      %567 = vmatmul.mubr.bf16.gmra.mrb[0].mxu0 %v391
      %v568 = vpop.f32.mrb[0].mxu0
      %v569 = vadd.f32 0.0, %v568
      %v570 = vpop.f32.mrb[0].mxu0
      %v571 = vpop.f32.mrb[0].mxu0
      %v572 = vadd.f32 0.0, %v571
      %v573 = vpop.f32.mrb[0].mxu0
      %574 = vmatprep.mubr.bf16.mxu0 0
      %575 = vmatmul.mubr.bf16.gmra.mrb[0].mxu0 %v392
      %v576 = vpop.f32.mrb[0].mxu0
      %v577 = vadd.f32 0.0, %v576
      %v578 = vpop.f32.mrb[0].mxu0
      %v579 = vpop.f32.mrb[0].mxu0
      %v580 = vadd.f32 0.0, %v579
      %v581 = vpop.f32.mrb[0].mxu0
      %582 = vmatprep.mubr.bf16.mxu0 0
      %583 = vmatmul.mubr.bf16.gmra.mrb[0].mxu0 %v393
      %v584 = vpop.f32.mrb[0].mxu0
      %v585 = vadd.f32 0.0, %v584
      %v586 = vpop.f32.mrb[0].mxu0
      %v587 = vpop.f32.mrb[0].mxu0
      %v588 = vadd.f32 0.0, %v587
      %v589 = vpop.f32.mrb[0].mxu0
      %590 = vmatprep.mubr.bf16.mxu0 0
      %591 = vmatmul.mubr.bf16.gmra.mrb[0].mxu0 %v394
      %v592 = vpop.f32.mrb[0].mxu0
      %v593 = vadd.f32 0.0, %v592
      %v594 = vpop.f32.mrb[0].mxu0
      %v595 = vpop.f32.mrb[0].mxu0
      %v596 = vadd.f32 0.0, %v595
      %v597 = vpop.f32.mrb[0].mxu0
      %598 = vmatprep.mubr.bf16.mxu0 0
      %599 = vmatmul.mubr.bf16.gmra.mrb[0].mxu0 %v395
      %v600 = vpop.f32.mrb[0].mxu0
      %v601 = vadd.f32 0.0, %v600
      %v602 = vpop.f32.mrb[0].mxu0
      %v603 = vpop.f32.mrb[0].mxu0
      %v604 = vadd.f32 0.0, %v603
      %v605 = vpop.f32.mrb[0].mxu0
      %606 = vmatprep.mubr.bf16.mxu0 0
      %607 = vmatmul.mubr.bf16.gmra.mrb[0].mxu0 %v396
      %v608 = vpop.f32.mrb[0].mxu0
      %v609 = vadd.f32 0.0, %v608
      %v610 = vpop.f32.mrb[0].mxu0
      %v611 = vpop.f32.mrb[0].mxu0
      %v612 = vadd.f32 0.0, %v611
      %v613 = vpop.f32.mrb[0].mxu0
      %614 = vmatprep.mubr.bf16.mxu0 0
      %615 = vmatmul.mubr.bf16.gmra.mrb[0].mxu0 %v397
      %v616 = vpop.f32.mrb[0].mxu0
      %v617 = vadd.f32 0.0, %v616
      %v618 = vpop.f32.mrb[0].mxu0
      %v619 = vpop.f32.mrb[0].mxu0
      %v620 = vadd.f32 0.0, %v619
      %v621 = vpop.f32.mrb[0].mxu0
      %622 = vdwg.mxu0
      %623 = vst [vmem:[%s226] sm:$0xff] %v497
      %624 = vst [vmem:[%s226 + $0x8] sm:$0xff] %v500
      %625 = vst [vmem:[%s226 + $0x10] sm:$0xff] %v505
      %626 = vst [vmem:[%s226 + $0x18] sm:$0xff] %v508
      %627 = vst [vmem:[%s226 + $0x20] sm:$0xff] %v513
      %628 = vst [vmem:[%s226 + $0x28] sm:$0xff] %v516
      %629 = vst [vmem:[%s226 + $0x30] sm:$0xff] %v521
      %630 = vst [vmem:[%s226 + $0x38] sm:$0xff] %v524
      %631 = vst [vmem:[%s226 + $0x40] sm:$0xff] %v529
      %632 = vst [vmem:[%s226 + $0x48] sm:$0xff] %v532
      %633 = vst [vmem:[%s226 + $0x50] sm:$0xff] %v537
      %634 = vst [vmem:[%s226 + $0x58] sm:$0xff] %v540
      %635 = vst [vmem:[%s226 + $0x60] sm:$0xff] %v545
      %636 = vst [vmem:[%s226 + $0x68] sm:$0xff] %v548
      %637 = vst [vmem:[%s226 + $0x70] sm:$0xff] %v553
      %638 = vst [vmem:[%s226 + $0x78] sm:$0xff] %v556
      %639 = vst [vmem:[%s226 + $0x80] sm:$0xff] %v561
      %640 = vst [vmem:[%s226 + $0x88] sm:$0xff] %v564
      %641 = vst [vmem:[%s226 + $0x90] sm:$0xff] %v569
      %642 = vst [vmem:[%s226 + $0x98] sm:$0xff] %v572
      %643 = vst [vmem:[%s226 + $0xa0] sm:$0xff] %v577
      %644 = vst [vmem:[%s226 + $0xa8] sm:$0xff] %v580
      %645 = vst [vmem:[%s226 + $0xb0] sm:$0xff] %v585
      %646 = vst [vmem:[%s226 + $0xb8] sm:$0xff] %v588
      %647 = vst [vmem:[%s226 + $0xc0] sm:$0xff] %v593
      %648 = vst [vmem:[%s226 + $0xc8] sm:$0xff] %v596
      %649 = vst [vmem:[%s226 + $0xd0] sm:$0xff] %v601
      %650 = vst [vmem:[%s226 + $0xd8] sm:$0xff] %v604
      %651 = vst [vmem:[%s226 + $0xe0] sm:$0xff] %v609
      %652 = vst [vmem:[%s226 + $0xe8] sm:$0xff] %v612
      %653 = vst [vmem:[%s226 + $0xf0] sm:$0xff] %v617
      %654 = vst [vmem:[%s226 + $0xf8] sm:$0xff] %v620
      %s655 = smul.u32 32, %s16
      %p656 = scmp.lt.s32.totalorder %s655, 127
      %s657 = scalar_select %p656, %s655, 127
      %s658 = smul.addr %s657, 8
      %s659 = scalar_lea.vmem %s5, %s658
      // Predicated region
      $region41: #{c5_head_forward.3} parent=39 // pred_check
        %p660 = pneg %p144
      $region42: #{c5_head_forward.3} parent=39 // pred_check_branch
        %662 = sbr.rel (%p660) target = $region44
      $region43: #{c5_head_forward.3} parent=39 // pred_region
        %s663 = smul.u32 32, %s16
      $region44: #{c5_head_forward.3} parent=39 // pred_fallthru
        _
    $region40: #{c5_head_forward.3} parent=5 // pred_fallthru
      _
    %p664 = scmp.le.s32.totalorder 2, %s11
    // Predicated region
    $region45: #{c5_head_forward.3} parent=5 // pred_check
      %p665 = pneg %p664
    $region46: #{c5_head_forward.3} parent=5 // pred_check_branch
      %667 = sbr.rel (%p665) target = $region48
    $region47: #{c5_head_forward.3} parent=5 // pred_region
      %s668 = ssub.s32 %s11, 2
      // Predicated region
      $region49: #{c5_head_forward.3} parent=47 // pred_check
        %p669 = pneg %p150
      $region50: #{c5_head_forward.3} parent=47 // pred_check_branch
        %671 = sbr.rel (%p669) target = $region52
      $region51: #{c5_head_forward.3} parent=47 // pred_region
        %s672 = smul.u32 32, %s17
        %p673 = scmp.lt.s32.totalorder %s672, 127
        %s674 = scalar_select %p673, %s672, 127
        %s675 = smul.addr %s674, 8
        %s676 = scalar_lea.vmem %s5, %s675
      $region52: #{c5_head_forward.3} parent=47 // pred_fallthru
        _
    $region48: #{c5_head_forward.3} parent=5 // pred_fallthru
      _
  $region6: #{c5_head_forward.3} parent=0 // loop_footer
    %s15 = sadd.s32 1, %s11
  $region7: #{c5_head_forward.3} parent=0 // loop_footer_branch
    %10 = sbr.rel target = $region3
  $region8: #{c5_head_forward.3} parent=0 // loop_exit
    _

</llo_original>
